<compile_context>
chip_gen: v7x
topology: tpu7x:2x2x1
jax: 0.10.0
libtpu: 0.0.40
codegen_flags: <defaults>
</compile_context>

<pallas_src>
import numpy as np
import jax
import jax.numpy as jnp
from jax.experimental import pallas as pl
from jax.experimental.pallas import tpu as pltpu

NODE_NUM = 9
NODE_OUTDIM = 11
EDGE_OUTDIM = 4
HIDDEN_DIMS = [64, 128, 32, 32]
NODE_FLAT = NODE_NUM * NODE_OUTDIM              # 99
EDGE_FLAT = NODE_NUM * NODE_NUM * EDGE_OUTDIM   # 324
N_NODE_GROUPS = NODE_NUM * 3                    # 27
N_EDGE_GROUPS = NODE_NUM * NODE_NUM             # 81

# Lane-padded section widths (multiples of 128 -> aligned slices, unmasked stores).
NODE_PAD = 128
EDGE_PAD = 384
HEADS_PAD = NODE_PAD + 2 * EDGE_PAD             # 896 = 7 * 128
OUT_PAD = NODE_PAD + EDGE_PAD                   # 512 = 4 * 128
NODE_GROUP_PAD = 32
EDGE_GROUP_PAD = 128

RELU_SLOPE = 0.1
DEN_EPS = 1e-30   # guards padded group columns + fully-underflowed groups (no NaN)


def _leaky_relu(x):
    # single VPU max instead of compare+select
    return jnp.maximum(x, RELU_SLOPE * x)


def adjgen_kernel(z_ref,
                  w1, b1, w2, b2, w3, b3, w4, b4,
                  wh, bh,
                  ge_down, ge_up, gn_down, gn_up,
                  out_ref):
    f32 = jnp.float32

    # MLP trunk: linear + leaky_relu x 4
    h = z_ref[...]
    h = _leaky_relu(jnp.dot(h, w1[...], preferred_element_type=f32) + b1[...])
    h = _leaky_relu(jnp.dot(h, w2[...], preferred_element_type=f32) + b2[...])
    h = _leaky_relu(jnp.dot(h, w3[...], preferred_element_type=f32) + b3[...])
    h = _leaky_relu(jnp.dot(h, w4[...], preferred_element_type=f32) + b4[...])

    # One fused head matmul: [node | edge | permuted edge], each 128-aligned.
    # Padding columns of wh/bh are zero -> padded lanes hold leaky_relu(0) = 0.
    heads = _leaky_relu(jnp.dot(h, wh[...], preferred_element_type=f32) + bh[...])
    xn = heads[:, :NODE_PAD]                              # (tb, 128), 99 used
    xe = heads[:, NODE_PAD:NODE_PAD + EDGE_PAD]           # (tb, 384), 324 used
    xet = heads[:, NODE_PAD + EDGE_PAD:]                  # (tb, 384), permuted edges

    # Edge symmetrization: A[b,i,j,:] <- (A[b,i,j,:] + A[b,j,i,:]) / 2
    sym = (xe + xet) * 0.5

    # Grouped softmax over trailing groups of 4 (81 groups).
    # Row-max (constant within every group) keeps exp stable without changing
    # the per-group softmax; DEN_EPS guards padded groups / total underflow.
    m_e = jnp.max(sym, axis=-1, keepdims=True)
    ee = jnp.exp(sym - m_e)
    den_e = jnp.maximum(
        jnp.dot(ee, ge_down[...], preferred_element_type=f32), DEN_EPS)   # (tb, 128)
    inv_e = jnp.dot(pl.reciprocal(den_e), ge_up[...],
                    preferred_element_type=f32)                           # (tb, 384)
    out_ref[:, NODE_PAD:] = ee * inv_e

    # Grouped softmax for node features: per node, groups [0:5), [5:8), [8:11).
    m_n = jnp.max(xn, axis=-1, keepdims=True)
    en = jnp.exp(xn - m_n)
    den_n = jnp.maximum(
        jnp.dot(en, gn_down[...], preferred_element_type=f32), DEN_EPS)   # (tb, 32)
    inv_n = jnp.dot(pl.reciprocal(den_n), gn_up[...],
                    preferred_element_type=f32)                           # (tb, 128)
    out_ref[:, :NODE_PAD] = en * inv_n


def _build_static_constants():
    """Permutation index (folded into head weights) and down/up group-sum matrices."""
    # perm_idx[dst=(i,j,c)] = src=(j,i,c): we_p[:, dst] = we[:, src]
    idx = np.arange(EDGE_FLAT, dtype=np.int64).reshape(NODE_NUM, NODE_NUM, EDGE_OUTDIM)
    perm_idx = np.transpose(idx, (1, 0, 2)).reshape(-1)

    # Edge group sums factored as (384 -> 128) down-projection then (128 -> 384) expand.
    ge_down = np.zeros((EDGE_PAD, EDGE_GROUP_PAD), np.float32)
    for r in range(EDGE_FLAT):
        ge_down[r, r // EDGE_OUTDIM] = 1.0
    ge_up = np.zeros((EDGE_GROUP_PAD, EDGE_PAD), np.float32)
    for g in range(N_EDGE_GROUPS):
        ge_up[g, g * EDGE_OUTDIM:(g + 1) * EDGE_OUTDIM] = 1.0

    # Node group sums: 27 groups (9 nodes x {[0:5),[5:8),[8:11)}), 128 -> 32 -> 128.
    bounds = [(0, 5), (5, 8), (8, 11)]
    gn_down = np.zeros((NODE_PAD, NODE_GROUP_PAD), np.float32)
    gn_up = np.zeros((NODE_GROUP_PAD, NODE_PAD), np.float32)
    for node in range(NODE_NUM):
        for k, (lo, hi) in enumerate(bounds):
            g = node * 3 + k
            cols = slice(node * NODE_OUTDIM + lo, node * NODE_OUTDIM + hi)
            gn_down[cols, g] = 1.0
            gn_up[g, cols] = 1.0

    return (perm_idx, jnp.asarray(ge_down), jnp.asarray(ge_up),
            jnp.asarray(gn_down), jnp.asarray(gn_up))


def _build_head_weights(params, perm_idx):
    """Fuse node head, edge head and PERMUTED edge head into one (32, 896) matrix.

    Permuting the weight/bias columns is bit-exact equivalent to permuting the
    head output (leaky_relu is elementwise), which removes the 324x324
    permutation matmul from the kernel entirely.
    """
    def pad_to(a, width):
        return jnp.pad(a, ((0, 0), (0, width - a.shape[1])))

    wn, bn = params["wn"], params["bn"]
    we, be = params["we"], params["be"]
    we_p = we[:, perm_idx]
    be_p = be[:, perm_idx]
    wh = jnp.concatenate(
        [pad_to(wn, NODE_PAD), pad_to(we, EDGE_PAD), pad_to(we_p, EDGE_PAD)], axis=1)
    bh = jnp.concatenate(
        [pad_to(bn, NODE_PAD), pad_to(be, EDGE_PAD), pad_to(be_p, EDGE_PAD)], axis=1)
    return wh, bh


def init_params(key, in_dim):
    """PyTorch-Linear-style deterministic init: U(-1/sqrt(fan_in), +1/sqrt(fan_in))."""
    dims = [in_dim] + HIDDEN_DIMS
    params = {}
    ks = jax.random.split(key, 2 * (len(HIDDEN_DIMS) + 2))
    ki = 0
    for li in range(len(HIDDEN_DIMS)):
        fan_in, fan_out = dims[li], dims[li + 1]
        bound = 1.0 / np.sqrt(fan_in)
        params[f"w{li+1}"] = jax.random.uniform(ks[ki], (fan_in, fan_out), jnp.float32, -bound, bound); ki += 1
        params[f"b{li+1}"] = jax.random.uniform(ks[ki], (1, fan_out), jnp.float32, -bound, bound); ki += 1
    fan_in = dims[-1]
    bound = 1.0 / np.sqrt(fan_in)
    params["wn"] = jax.random.uniform(ks[ki], (fan_in, NODE_FLAT), jnp.float32, -bound, bound); ki += 1
    params["bn"] = jax.random.uniform(ks[ki], (1, NODE_FLAT), jnp.float32, -bound, bound); ki += 1
    params["we"] = jax.random.uniform(ks[ki], (fan_in, EDGE_FLAT), jnp.float32, -bound, bound); ki += 1
    params["be"] = jax.random.uniform(ks[ki], (1, EDGE_FLAT), jnp.float32, -bound, bound); ki += 1
    return params


def adj_generator_qm_forward(z, params, *, tb=None):
    """Pallas implementation of the dense node/edge generation (without_aroma=False).

    Returns:
      out_x : (N, 9, 12) float32
      out_A : (N, 9, 9, 4) float32
    """
    N, D = z.shape
    if tb is None:
        # Explicit batch tile so there are multiple grid steps for large N
        # (real output-DMA pipelining, both TensorCores on v7x). 512 fits all
        # listed chips' VMEM comfortably; raise toward 1024-2048 on v6e/v5e if
        # desired (bump vmem_limit_bytes accordingly).
        tb = min(512, max(8, -(-N // 8) * 8))
    assert tb % 8 == 0
    n_tiles = -(-N // tb)
    n_pad = n_tiles * tb
    zp = jnp.pad(z, ((0, n_pad - N), (0, 0))) if n_pad != N else z

    perm_idx, ge_down, ge_up, gn_down, gn_up = _build_static_constants()
    wh, bh = _build_head_weights(params, perm_idx)

    consts = []
    for li in range(len(HIDDEN_DIMS)):
        consts += [params[f"w{li+1}"], params[f"b{li+1}"]]
    consts += [wh, bh, ge_down, ge_up, gn_down, gn_up]

    def full_spec(a):
        # full-array block, same block index every grid step (never re-fetched)
        return pl.BlockSpec(a.shape, lambda i: (0,) * a.ndim)

    in_specs = [pl.BlockSpec((tb, D), lambda i: (i, 0))] + [full_spec(a) for a in consts]
    out_spec = pl.BlockSpec((tb, OUT_PAD), lambda i: (i, 0))

    const_bytes = sum(int(np.prod(a.shape)) * 4 for a in consts)
    flops_row = 2 * (D * 64 + 64 * 128 + 128 * 32 + 32 * 32 + 32 * HEADS_PAD
                     + EDGE_PAD * EDGE_GROUP_PAD + EDGE_GROUP_PAD * EDGE_PAD
                     + NODE_PAD * NODE_GROUP_PAD + NODE_GROUP_PAD * NODE_PAD)
    cost = pl.CostEstimate(
        flops=int(n_pad * flops_row),
        transcendentals=int(n_pad * (NODE_PAD + EDGE_PAD)),
        bytes_accessed=int(n_pad * (D + OUT_PAD) * 4 + const_bytes),
    )

    out = pl.pallas_call(
        adjgen_kernel,
        out_shape=jax.ShapeDtypeStruct((n_pad, OUT_PAD), jnp.float32),
        grid=(n_tiles,),
        in_specs=in_specs,
        out_specs=out_spec,
        compiler_params=pltpu.CompilerParams(
            dimension_semantics=("parallel",),
            vmem_limit_bytes=32 * 1024 * 1024,
        ),
        cost_estimate=cost,
    )(zp, *consts)

    # Glue: slice lane-dense sections, reshape, append the constant aromatic
    # column (softmax over the single appended "ones" column is identically 1).
    out_x = out[:N, :NODE_FLAT].reshape(N, NODE_NUM, NODE_OUTDIM)
    out_x = jnp.concatenate([out_x, jnp.ones((N, NODE_NUM, 1), jnp.float32)], axis=-1)
    out_A = out[:N, NODE_PAD:NODE_PAD + EDGE_FLAT].reshape(N, NODE_NUM, NODE_NUM, EDGE_OUTDIM)
    return out_x, out_A


def reference_forward(z, params):
    """Pure-JAX reference mirroring the PyTorch generate_XA semantics."""
    h = z
    for li in range(len(HIDDEN_DIMS)):
        h = jnp.where(h @ params[f"w{li+1}"] + params[f"b{li+1}"] > 0,
                      h @ params[f"w{li+1}"] + params[f"b{li+1}"],
                      RELU_SLOPE * (h @ params[f"w{li+1}"] + params[f"b{li+1}"]))
    xn = h @ params["wn"] + params["bn"]
    xn = jnp.where(xn > 0, xn, RELU_SLOPE * xn).reshape(-1, NODE_NUM, NODE_OUTDIM)
    xe = h @ params["we"] + params["be"]
    xe = jnp.where(xe > 0, xe, RELU_SLOPE * xe).reshape(-1, NODE_NUM, NODE_NUM, EDGE_OUTDIM)
    a = (xe + jnp.transpose(xe, (0, 2, 1, 3))) / 2.0
    a = jax.nn.softmax(a, axis=-1)
    ox1 = jax.nn.softmax(xn[:, :, :5], axis=-1)
    ox2 = jax.nn.softmax(xn[:, :, 5:8], axis=-1)
    ox3 = jax.nn.softmax(xn[:, :, 8:11], axis=-1)
    ox4 = jnp.ones((xn.shape[0], NODE_NUM, 1), jnp.float32)
    out_x = jnp.concatenate([ox1, ox2, ox3, ox4], axis=-1)
    return out_x, a


if __name__ == "__main__":
    key = jax.random.PRNGKey(0)
    k_z, k_p, k_z2 = jax.random.split(key, 3)

    N, IN_DIM = 8, 32
    z = jax.random.normal(k_z, (N, IN_DIM), jnp.float32)
    params = init_params(k_p, IN_DIM)

    out_x, out_A = adj_generator_qm_forward(z, params)
    out_x = jax.block_until_ready(out_x)
    out_A = jax.block_until_ready(out_A)

    ref_x, ref_A = reference_forward(z, params)
    assert out_x.shape == (N, NODE_NUM, NODE_OUTDIM + 1)
    assert out_A.shape == (N, NODE_NUM, NODE_NUM, EDGE_OUTDIM)
    np.testing.assert_allclose(np.asarray(out_x), np.asarray(ref_x), rtol=1e-4, atol=1e-5)
    np.testing.assert_allclose(np.asarray(out_A), np.asarray(ref_A), rtol=1e-4, atol=1e-5)

    # Multi-tile / padded-batch path: grid > 1 and N not a multiple of tb.
    N2 = 20
    z2 = jax.random.normal(k_z2, (N2, IN_DIM), jnp.float32)
    out_x2, out_A2 = adj_generator_qm_forward(z2, params, tb=8)
    out_x2 = jax.block_until_ready(out_x2)
    out_A2 = jax.block_until_ready(out_A2)
    ref_x2, ref_A2 = reference_forward(z2, params)
    np.testing.assert_allclose(np.asarray(out_x2), np.asarray(ref_x2), rtol=1e-4, atol=1e-5)
    np.testing.assert_allclose(np.asarray(out_A2), np.asarray(ref_A2), rtol=1e-4, atol=1e-5)

    print("KERNEL_OK")
</pallas_src>

<mosaic_0001>
module attributes {stable_mosaic.version = 11 : i64} {
  func.func @adjgen_kernel(%arg0: i32, %arg1: memref<8x32xf32, #tpu.memory_space<vmem>>, %arg2: memref<32x64xf32, #tpu.memory_space<vmem>>, %arg3: memref<1x64xf32, #tpu.memory_space<vmem>>, %arg4: memref<64x128xf32, #tpu.memory_space<vmem>>, %arg5: memref<1x128xf32, #tpu.memory_space<vmem>>, %arg6: memref<128x32xf32, #tpu.memory_space<vmem>>, %arg7: memref<1x32xf32, #tpu.memory_space<vmem>>, %arg8: memref<32x32xf32, #tpu.memory_space<vmem>>, %arg9: memref<1x32xf32, #tpu.memory_space<vmem>>, %arg10: memref<32x896xf32, #tpu.memory_space<vmem>>, %arg11: memref<1x896xf32, #tpu.memory_space<vmem>>, %arg12: memref<384x128xf32, #tpu.memory_space<vmem>>, %arg13: memref<128x384xf32, #tpu.memory_space<vmem>>, %arg14: memref<128x32xf32, #tpu.memory_space<vmem>>, %arg15: memref<32x128xf32, #tpu.memory_space<vmem>>, %arg16: memref<8x512xf32, #tpu.memory_space<vmem>>) attributes {dimension_semantics = [#tpu.dimension_semantics<parallel>], iteration_bounds = array<i64: 1>, scalar_prefetch = 0 : i64, scratch_operands = 0 : i64, tpu.core_type = #tpu.core_type<tc>, window_params = [{transform_indices = @transform_0, window_bounds = array<i64: 8, 32>}, {pipeline_mode = #tpu.pipeline_mode<synchronous>, transform_indices = @transform_1, window_bounds = array<i64: 32, 64>}, {pipeline_mode = #tpu.pipeline_mode<synchronous>, transform_indices = @transform_2, window_bounds = array<i64: 1, 64>}, {pipeline_mode = #tpu.pipeline_mode<synchronous>, transform_indices = @transform_3, window_bounds = array<i64: 64, 128>}, {pipeline_mode = #tpu.pipeline_mode<synchronous>, transform_indices = @transform_4, window_bounds = array<i64: 1, 128>}, {pipeline_mode = #tpu.pipeline_mode<synchronous>, transform_indices = @transform_5, window_bounds = array<i64: 128, 32>}, {pipeline_mode = #tpu.pipeline_mode<synchronous>, transform_indices = @transform_6, window_bounds = array<i64: 1, 32>}, {pipeline_mode = #tpu.pipeline_mode<synchronous>, transform_indices = @transform_7, window_bounds = array<i64: 32, 32>}, {pipeline_mode = #tpu.pipeline_mode<synchronous>, transform_indices = @transform_8, window_bounds = array<i64: 1, 32>}, {pipeline_mode = #tpu.pipeline_mode<synchronous>, transform_indices = @transform_9, window_bounds = array<i64: 32, 896>}, {pipeline_mode = #tpu.pipeline_mode<synchronous>, transform_indices = @transform_10, window_bounds = array<i64: 1, 896>}, {pipeline_mode = #tpu.pipeline_mode<synchronous>, transform_indices = @transform_11, window_bounds = array<i64: 384, 128>}, {pipeline_mode = #tpu.pipeline_mode<synchronous>, transform_indices = @transform_12, window_bounds = array<i64: 128, 384>}, {pipeline_mode = #tpu.pipeline_mode<synchronous>, transform_indices = @transform_13, window_bounds = array<i64: 128, 32>}, {pipeline_mode = #tpu.pipeline_mode<synchronous>, transform_indices = @transform_14, window_bounds = array<i64: 32, 128>}, {transform_indices = @transform_15, window_bounds = array<i64: 8, 512>}]} {
    %c0 = arith.constant 0 : index
    %c0_0 = arith.constant 0 : index
    %0 = vector.load %arg1[%c0, %c0_0] : memref<8x32xf32, #tpu.memory_space<vmem>>, vector<8x32xf32>
    %c0_1 = arith.constant 0 : index
    %c0_2 = arith.constant 0 : index
    %1 = vector.load %arg2[%c0_1, %c0_2] : memref<32x64xf32, #tpu.memory_space<vmem>>, vector<32x64xf32>
    %cst = arith.constant dense<0.000000e+00> : vector<8x64xf32>
    %2 = tpu.matmul %0, %1, %cst {dimension_numbers = #tpu.dot_dimension_numbers<[1], [0], [0], [1], [0, 0, 1, 1], [], []>} : vector<8x32xf32>, vector<32x64xf32>, vector<8x64xf32> -> vector<8x64xf32>
    %c0_3 = arith.constant 0 : index
    %c0_4 = arith.constant 0 : index
    %3 = vector.load %arg3[%c0_3, %c0_4] : memref<1x64xf32, #tpu.memory_space<vmem>>, vector<1x64xf32>
    %4 = vector.broadcast %3 : vector<1x64xf32> to vector<8x64xf32>
    %5 = arith.addf %2, %4 : vector<8x64xf32>
    %cst_5 = arith.constant 1.000000e-01 : f32
    %6 = vector.broadcast %cst_5 : f32 to vector<8x64xf32>
    %7 = arith.mulf %6, %5 : vector<8x64xf32>
    %8 = arith.maximumf %5, %7 : vector<8x64xf32>
    %c0_6 = arith.constant 0 : index
    %c0_7 = arith.constant 0 : index
    %9 = vector.load %arg4[%c0_6, %c0_7] : memref<64x128xf32, #tpu.memory_space<vmem>>, vector<64x128xf32>
    %cst_8 = arith.constant dense<0.000000e+00> : vector<8x128xf32>
    %10 = tpu.matmul %8, %9, %cst_8 {dimension_numbers = #tpu.dot_dimension_numbers<[1], [0], [0], [1], [0, 0, 1, 1], [], []>} : vector<8x64xf32>, vector<64x128xf32>, vector<8x128xf32> -> vector<8x128xf32>
    %c0_9 = arith.constant 0 : index
    %c0_10 = arith.constant 0 : index
    %11 = vector.load %arg5[%c0_9, %c0_10] : memref<1x128xf32, #tpu.memory_space<vmem>>, vector<1x128xf32>
    %12 = vector.broadcast %11 : vector<1x128xf32> to vector<8x128xf32>
    %13 = arith.addf %10, %12 : vector<8x128xf32>
    %cst_11 = arith.constant 1.000000e-01 : f32
    %14 = vector.broadcast %cst_11 : f32 to vector<8x128xf32>
    %15 = arith.mulf %14, %13 : vector<8x128xf32>
    %16 = arith.maximumf %13, %15 : vector<8x128xf32>
    %c0_12 = arith.constant 0 : index
    %c0_13 = arith.constant 0 : index
    %17 = vector.load %arg6[%c0_12, %c0_13] : memref<128x32xf32, #tpu.memory_space<vmem>>, vector<128x32xf32>
    %cst_14 = arith.constant dense<0.000000e+00> : vector<8x32xf32>
    %18 = tpu.matmul %16, %17, %cst_14 {dimension_numbers = #tpu.dot_dimension_numbers<[1], [0], [0], [1], [0, 0, 1, 1], [], []>} : vector<8x128xf32>, vector<128x32xf32>, vector<8x32xf32> -> vector<8x32xf32>
    %c0_15 = arith.constant 0 : index
    %c0_16 = arith.constant 0 : index
    %19 = vector.load %arg7[%c0_15, %c0_16] : memref<1x32xf32, #tpu.memory_space<vmem>>, vector<1x32xf32>
    %20 = vector.broadcast %19 : vector<1x32xf32> to vector<8x32xf32>
    %21 = arith.addf %18, %20 : vector<8x32xf32>
    %cst_17 = arith.constant 1.000000e-01 : f32
    %22 = vector.broadcast %cst_17 : f32 to vector<8x32xf32>
    %23 = arith.mulf %22, %21 : vector<8x32xf32>
    %24 = arith.maximumf %21, %23 : vector<8x32xf32>
    %c0_18 = arith.constant 0 : index
    %c0_19 = arith.constant 0 : index
    %25 = vector.load %arg8[%c0_18, %c0_19] : memref<32x32xf32, #tpu.memory_space<vmem>>, vector<32x32xf32>
    %cst_20 = arith.constant dense<0.000000e+00> : vector<8x32xf32>
    %26 = tpu.matmul %24, %25, %cst_20 {dimension_numbers = #tpu.dot_dimension_numbers<[1], [0], [0], [1], [0, 0, 1, 1], [], []>} : vector<8x32xf32>, vector<32x32xf32>, vector<8x32xf32> -> vector<8x32xf32>
    %c0_21 = arith.constant 0 : index
    %c0_22 = arith.constant 0 : index
    %27 = vector.load %arg9[%c0_21, %c0_22] : memref<1x32xf32, #tpu.memory_space<vmem>>, vector<1x32xf32>
    %28 = vector.broadcast %27 : vector<1x32xf32> to vector<8x32xf32>
    %29 = arith.addf %26, %28 : vector<8x32xf32>
    %cst_23 = arith.constant 1.000000e-01 : f32
    %30 = vector.broadcast %cst_23 : f32 to vector<8x32xf32>
    %31 = arith.mulf %30, %29 : vector<8x32xf32>
    %32 = arith.maximumf %29, %31 : vector<8x32xf32>
    %c0_24 = arith.constant 0 : index
    %c0_25 = arith.constant 0 : index
    %33 = vector.load %arg10[%c0_24, %c0_25] : memref<32x896xf32, #tpu.memory_space<vmem>>, vector<32x896xf32>
    %cst_26 = arith.constant dense<0.000000e+00> : vector<8x896xf32>
    %34 = tpu.matmul %32, %33, %cst_26 {dimension_numbers = #tpu.dot_dimension_numbers<[1], [0], [0], [1], [0, 0, 1, 1], [], []>} : vector<8x32xf32>, vector<32x896xf32>, vector<8x896xf32> -> vector<8x896xf32>
    %c0_27 = arith.constant 0 : index
    %c0_28 = arith.constant 0 : index
    %35 = vector.load %arg11[%c0_27, %c0_28] : memref<1x896xf32, #tpu.memory_space<vmem>>, vector<1x896xf32>
    %36 = vector.broadcast %35 : vector<1x896xf32> to vector<8x896xf32>
    %37 = arith.addf %34, %36 : vector<8x896xf32>
    %cst_29 = arith.constant 1.000000e-01 : f32
    %38 = vector.broadcast %cst_29 : f32 to vector<8x896xf32>
    %39 = arith.mulf %38, %37 : vector<8x896xf32>
    %40 = arith.maximumf %37, %39 : vector<8x896xf32>
    %41 = vector.extract_strided_slice %40 {offsets = [0, 0], sizes = [8, 128], strides = [1, 1]} : vector<8x896xf32> to vector<8x128xf32>
    %42 = vector.extract_strided_slice %40 {offsets = [0, 128], sizes = [8, 384], strides = [1, 1]} : vector<8x896xf32> to vector<8x384xf32>
    %43 = vector.extract_strided_slice %40 {offsets = [0, 512], sizes = [8, 384], strides = [1, 1]} : vector<8x896xf32> to vector<8x384xf32>
    %44 = arith.addf %42, %43 : vector<8x384xf32>
    %cst_30 = arith.constant 5.000000e-01 : f32
    %45 = vector.broadcast %cst_30 : f32 to vector<8x384xf32>
    %46 = arith.mulf %44, %45 : vector<8x384xf32>
    %cst_31 = arith.constant dense<0xFF800000> : vector<8xf32>
    %47 = vector.multi_reduction <maximumf>, %46, %cst_31 [1] : vector<8x384xf32> to vector<8xf32>
    %48 = vector.shape_cast %47 : vector<8xf32> to vector<8x1xf32>
    %49 = vector.broadcast %48 : vector<8x1xf32> to vector<8x384xf32>
    %50 = arith.subf %46, %49 : vector<8x384xf32>
    %51 = math.exp %50 : vector<8x384xf32>
    %c0_32 = arith.constant 0 : index
    %c0_33 = arith.constant 0 : index
    %52 = vector.load %arg12[%c0_32, %c0_33] : memref<384x128xf32, #tpu.memory_space<vmem>>, vector<384x128xf32>
    %cst_34 = arith.constant dense<0.000000e+00> : vector<8x128xf32>
    %53 = tpu.matmul %51, %52, %cst_34 {dimension_numbers = #tpu.dot_dimension_numbers<[1], [0], [0], [1], [0, 0, 1, 1], [], []>} : vector<8x384xf32>, vector<384x128xf32>, vector<8x128xf32> -> vector<8x128xf32>
    %cst_35 = arith.constant 1.000000e-30 : f32
    %54 = vector.broadcast %cst_35 : f32 to vector<8x128xf32>
    %55 = arith.maximumf %53, %54 : vector<8x128xf32>
    %56 = tpu.reciprocal %55 : vector<8x128xf32> -> vector<8x128xf32>
    %c0_36 = arith.constant 0 : index
    %c0_37 = arith.constant 0 : index
    %57 = vector.load %arg13[%c0_36, %c0_37] : memref<128x384xf32, #tpu.memory_space<vmem>>, vector<128x384xf32>
    %cst_38 = arith.constant dense<0.000000e+00> : vector<8x384xf32>
    %58 = tpu.matmul %56, %57, %cst_38 {dimension_numbers = #tpu.dot_dimension_numbers<[1], [0], [0], [1], [0, 0, 1, 1], [], []>} : vector<8x128xf32>, vector<128x384xf32>, vector<8x384xf32> -> vector<8x384xf32>
    %59 = arith.mulf %51, %58 : vector<8x384xf32>
    %c0_39 = arith.constant 0 : index
    %c128 = arith.constant 128 : index
    %60 = vector.load %arg16[%c0_39, %c128] : memref<8x512xf32, #tpu.memory_space<vmem>>, vector<8x384xf32>
    tpu.vector_store %arg16[%c0_39, %c128], %59 {strides = array<i32>} : memref<8x512xf32, #tpu.memory_space<vmem>>, vector<8x384xf32>,
    %cst_40 = arith.constant dense<0xFF800000> : vector<8xf32>
    %61 = vector.multi_reduction <maximumf>, %41, %cst_40 [1] : vector<8x128xf32> to vector<8xf32>
    %62 = vector.shape_cast %61 : vector<8xf32> to vector<8x1xf32>
    %63 = vector.broadcast %62 : vector<8x1xf32> to vector<8x128xf32>
    %64 = arith.subf %41, %63 : vector<8x128xf32>
    %65 = math.exp %64 : vector<8x128xf32>
    %c0_41 = arith.constant 0 : index
    %c0_42 = arith.constant 0 : index
    %66 = vector.load %arg14[%c0_41, %c0_42] : memref<128x32xf32, #tpu.memory_space<vmem>>, vector<128x32xf32>
    %cst_43 = arith.constant dense<0.000000e+00> : vector<8x32xf32>
    %67 = tpu.matmul %65, %66, %cst_43 {dimension_numbers = #tpu.dot_dimension_numbers<[1], [0], [0], [1], [0, 0, 1, 1], [], []>} : vector<8x128xf32>, vector<128x32xf32>, vector<8x32xf32> -> vector<8x32xf32>
    %cst_44 = arith.constant 1.000000e-30 : f32
    %68 = vector.broadcast %cst_44 : f32 to vector<8x32xf32>
    %69 = arith.maximumf %67, %68 : vector<8x32xf32>
    %70 = tpu.reciprocal %69 : vector<8x32xf32> -> vector<8x32xf32>
    %c0_45 = arith.constant 0 : index
    %c0_46 = arith.constant 0 : index
    %71 = vector.load %arg15[%c0_45, %c0_46] : memref<32x128xf32, #tpu.memory_space<vmem>>, vector<32x128xf32>
    %cst_47 = arith.constant dense<0.000000e+00> : vector<8x128xf32>
    %72 = tpu.matmul %70, %71, %cst_47 {dimension_numbers = #tpu.dot_dimension_numbers<[1], [0], [0], [1], [0, 0, 1, 1], [], []>} : vector<8x32xf32>, vector<32x128xf32>, vector<8x128xf32> -> vector<8x128xf32>
    %73 = arith.mulf %65, %72 : vector<8x128xf32>
    %c0_48 = arith.constant 0 : index
    %c0_49 = arith.constant 0 : index
    %74 = vector.load %arg16[%c0_48, %c0_49] : memref<8x512xf32, #tpu.memory_space<vmem>>, vector<8x128xf32>
    tpu.vector_store %arg16[%c0_48, %c0_49], %73 {strides = array<i32>} : memref<8x512xf32, #tpu.memory_space<vmem>>, vector<8x128xf32>,
    return
  }
  func.func @transform_0(%arg0: i32) -> (i32, i32) {
    %c0_i32 = arith.constant 0 : i32
    %c0_i32_0 = arith.constant 0 : i32
    return %arg0, %c0_i32 : i32, i32
  }
  func.func @transform_1(%arg0: i32) -> (i32, i32) {
    %c0_i32 = arith.constant 0 : i32
    %c0_i32_0 = arith.constant 0 : i32
    %c0_i32_1 = arith.constant 0 : i32
    return %c0_i32, %c0_i32_0 : i32, i32
  }
  func.func @transform_2(%arg0: i32) -> (i32, i32) {
    %c0_i32 = arith.constant 0 : i32
    %c0_i32_0 = arith.constant 0 : i32
    %c0_i32_1 = arith.constant 0 : i32
    return %c0_i32, %c0_i32_0 : i32, i32
  }
  func.func @transform_3(%arg0: i32) -> (i32, i32) {
    %c0_i32 = arith.constant 0 : i32
    %c0_i32_0 = arith.constant 0 : i32
    %c0_i32_1 = arith.constant 0 : i32
    return %c0_i32, %c0_i32_0 : i32, i32
  }
  func.func @transform_4(%arg0: i32) -> (i32, i32) {
    %c0_i32 = arith.constant 0 : i32
    %c0_i32_0 = arith.constant 0 : i32
    %c0_i32_1 = arith.constant 0 : i32
    return %c0_i32, %c0_i32_0 : i32, i32
  }
  func.func @transform_5(%arg0: i32) -> (i32, i32) {
    %c0_i32 = arith.constant 0 : i32
    %c0_i32_0 = arith.constant 0 : i32
    %c0_i32_1 = arith.constant 0 : i32
    return %c0_i32, %c0_i32_0 : i32, i32
  }
  func.func @transform_6(%arg0: i32) -> (i32, i32) {
    %c0_i32 = arith.constant 0 : i32
    %c0_i32_0 = arith.constant 0 : i32
    %c0_i32_1 = arith.constant 0 : i32
    return %c0_i32, %c0_i32_0 : i32, i32
  }
  func.func @transform_7(%arg0: i32) -> (i32, i32) {
    %c0_i32 = arith.constant 0 : i32
    %c0_i32_0 = arith.constant 0 : i32
    %c0_i32_1 = arith.constant 0 : i32
    return %c0_i32, %c0_i32_0 : i32, i32
  }
  func.func @transform_8(%arg0: i32) -> (i32, i32) {
    %c0_i32 = arith.constant 0 : i32
    %c0_i32_0 = arith.constant 0 : i32
    %c0_i32_1 = arith.constant 0 : i32
    return %c0_i32, %c0_i32_0 : i32, i32
  }
  func.func @transform_9(%arg0: i32) -> (i32, i32) {
    %c0_i32 = arith.constant 0 : i32
    %c0_i32_0 = arith.constant 0 : i32
    %c0_i32_1 = arith.constant 0 : i32
    return %c0_i32, %c0_i32_0 : i32, i32
  }
  func.func @transform_10(%arg0: i32) -> (i32, i32) {
    %c0_i32 = arith.constant 0 : i32
    %c0_i32_0 = arith.constant 0 : i32
    %c0_i32_1 = arith.constant 0 : i32
    return %c0_i32, %c0_i32_0 : i32, i32
  }
  func.func @transform_11(%arg0: i32) -> (i32, i32) {
    %c0_i32 = arith.constant 0 : i32
    %c0_i32_0 = arith.constant 0 : i32
    %c0_i32_1 = arith.constant 0 : i32
    return %c0_i32, %c0_i32_0 : i32, i32
  }
  func.func @transform_12(%arg0: i32) -> (i32, i32) {
    %c0_i32 = arith.constant 0 : i32
    %c0_i32_0 = arith.constant 0 : i32
    %c0_i32_1 = arith.constant 0 : i32
    return %c0_i32, %c0_i32_0 : i32, i32
  }
  func.func @transform_13(%arg0: i32) -> (i32, i32) {
    %c0_i32 = arith.constant 0 : i32
    %c0_i32_0 = arith.constant 0 : i32
    %c0_i32_1 = arith.constant 0 : i32
    return %c0_i32, %c0_i32_0 : i32, i32
  }
  func.func @transform_14(%arg0: i32) -> (i32, i32) {
    %c0_i32 = arith.constant 0 : i32
    %c0_i32_0 = arith.constant 0 : i32
    %c0_i32_1 = arith.constant 0 : i32
    return %c0_i32, %c0_i32_0 : i32, i32
  }
  func.func @transform_15(%arg0: i32) -> (i32, i32) {
    %c0_i32 = arith.constant 0 : i32
    %c0_i32_0 = arith.constant 0 : i32
    return %arg0, %c0_i32 : i32, i32
  }
}

</mosaic_0001>

<llo_original>
// kernel: tpu_custom_call.1
$region0: #{tpu_custom_call.1}
  #allocation0 [shape = 'u32[]', space=smem, size = 0x4, offset = 0x4, fixed_abs, tag = 'smem constant byte address 0x4 - core index']
  #allocation1 [shape = 'u32[144,128]{1,0:T(1,128)}', space=vmem, size = 0x12000, scoped, tag = 'internal scratch']
  %s0 = inlined_call_operand.hbm [shape: f32[8,32], index: 0, kind: input, shape index: {}]
  %s1 = inlined_call_operand.vmem [shape: f32[32,64], index: 1, kind: input, shape index: {}]
  %s2 = inlined_call_operand.vmem [shape: f32[1,64], index: 2, kind: input, shape index: {}]
  %s3 = inlined_call_operand.vmem [shape: f32[64,128], index: 3, kind: input, shape index: {}]
  %s4 = inlined_call_operand.vmem [shape: f32[1,128], index: 4, kind: input, shape index: {}]
  %s5 = inlined_call_operand.vmem [shape: f32[128,32], index: 5, kind: input, shape index: {}]
  %s6 = inlined_call_operand.vmem [shape: f32[1,32], index: 6, kind: input, shape index: {}]
  %s7 = inlined_call_operand.hbm [shape: f32[32,32], index: 7, kind: input, shape index: {}]
  %s8 = inlined_call_operand.vmem [shape: f32[1,32], index: 8, kind: input, shape index: {}]
  %s9 = inlined_call_operand.vmem [shape: f32[32,896], index: 9, kind: input, shape index: {}]
  %s10 = inlined_call_operand.hbm [shape: f32[1,896], index: 10, kind: input, shape index: {}]
  %s11 = inlined_call_operand.hbm [shape: f32[384,128], index: 11, kind: input, shape index: {}]
  %s12 = inlined_call_operand.hbm [shape: f32[128,384], index: 12, kind: input, shape index: {}]
  %s13 = inlined_call_operand.vmem [shape: f32[128,32], index: 13, kind: input, shape index: {}]
  %s14 = inlined_call_operand.hbm [shape: f32[32,128], index: 14, kind: input, shape index: {}]
  %s15 = inlined_call_operand.hbm [shape: f32[8,512], index: 15, kind: output, shape index: {}]
  %s16 = sld [smem:[#allocation0]]
  $region94: #{tpu_custom_call.1} parent=0
    _
  %s18 = ssub.s32 1, %s16
  %s19 = scalar_select 0, %s18, %s16
  $region1: #{tpu_custom_call.1} parent=0
    #allocation2 [shape = 'u8[4096]{0}', space=vmem, size = 0x1000, scoped, tag = 'input window, operand 0, single buffered']
    #allocation3 [shape = 's32[1]{0}', space=sflag, size = 0x4, scoped, tag = 'scoped memory for tpu_custom_call.1']
    #allocation4 [shape = 's32[1]{0}', space=sflag, size = 0x4, scoped, tag = 'scoped memory for tpu_custom_call.1']
    #allocation5 [shape = 'u8[16384]{0}', space=vmem, size = 0x4000, scoped, tag = 'input window, operand 7, single buffered']
    #allocation6 [shape = 's32[1]{0}', space=sflag, size = 0x4, scoped, tag = 'scoped memory for tpu_custom_call.1']
    #allocation7 [shape = 'u8[3584]{0}', space=vmem, size = 0x1000, scoped, tag = 'input window, operand 10, single buffered']
    #allocation8 [shape = 'u8[196608]{0}', space=vmem, size = 0x30000, scoped, tag = 'input window, operand 11, single buffered']
    #allocation9 [shape = 's32[1]{0}', space=sflag, size = 0x4, scoped, tag = 'scoped memory for tpu_custom_call.1']
    #allocation10 [shape = 'u8[196608]{0}', space=vmem, size = 0x30000, scoped, tag = 'input window, operand 12, single buffered']
    #allocation11 [shape = 'u8[16384]{0}', space=vmem, size = 0x4000, scoped, tag = 'input window, operand 14, single buffered']
    #allocation12 [shape = 's32[1]{0}', space=sflag, size = 0x4, scoped, tag = 'scoped memory for tpu_custom_call.1']
    #allocation13 [shape = 'u8[16384]{0}', space=vmem, size = 0x4000, scoped, tag = 'output window, operand 0, single buffered']
    %20 = vsyncpa [#allocation3], 0
    %21 = vsyncpa [#allocation6], 0
    %22 = vsyncpa [#allocation9], 0
    %23 = vsyncpa [#allocation12], 0
    %24 = vsyncpa [#allocation4], 0
    // Predicated region
    $region2: #{tpu_custom_call.1} parent=1 // pred_check
      _
    $region3: #{tpu_custom_call.1} parent=1 // pred_check_branch
      %26 = sbr.rel (0) target = $region5
    $region4: #{tpu_custom_call.1} parent=1 // pred_region
      %s28 = ssub.s32 128, 128
      %29 = vsyncadd [#allocation3], %s28
      %s31 = sshll.u32 [#allocation2], 4
      %s32 = int_to_ptr.vmem [resolvable:$true] %s31
      %34 = dma.hbm_to_vmem [thread:$0]  %s0, 128, %s32, [#allocation3]
    $region5: #{tpu_custom_call.1} parent=1 // pred_fallthru
      _
    // Predicated region
    $region6: #{tpu_custom_call.1} parent=1 // pred_check
      _
    $region7: #{tpu_custom_call.1} parent=1 // pred_check_branch
      %36 = sbr.rel (0) target = $region9
    $region8: #{tpu_custom_call.1} parent=1 // pred_region
      _
    $region9: #{tpu_custom_call.1} parent=1 // pred_fallthru
      _
    // Predicated region
    $region10: #{tpu_custom_call.1} parent=1 // pred_check
      _
    $region11: #{tpu_custom_call.1} parent=1 // pred_check_branch
      %38 = sbr.rel (0) target = $region13
    $region12: #{tpu_custom_call.1} parent=1 // pred_region
      _
    $region13: #{tpu_custom_call.1} parent=1 // pred_fallthru
      _
    // Predicated region
    $region14: #{tpu_custom_call.1} parent=1 // pred_check
      _
    $region15: #{tpu_custom_call.1} parent=1 // pred_check_branch
      %40 = sbr.rel (0) target = $region17
    $region16: #{tpu_custom_call.1} parent=1 // pred_region
      _
    $region17: #{tpu_custom_call.1} parent=1 // pred_fallthru
      _
    // Predicated region
    $region18: #{tpu_custom_call.1} parent=1 // pred_check
      _
    $region19: #{tpu_custom_call.1} parent=1 // pred_check_branch
      %42 = sbr.rel (0) target = $region21
    $region20: #{tpu_custom_call.1} parent=1 // pred_region
      _
    $region21: #{tpu_custom_call.1} parent=1 // pred_fallthru
      _
    // Predicated region
    $region22: #{tpu_custom_call.1} parent=1 // pred_check
      _
    $region23: #{tpu_custom_call.1} parent=1 // pred_check_branch
      %44 = sbr.rel (0) target = $region25
    $region24: #{tpu_custom_call.1} parent=1 // pred_region
      _
    $region25: #{tpu_custom_call.1} parent=1 // pred_fallthru
      _
    // Predicated region
    $region26: #{tpu_custom_call.1} parent=1 // pred_check
      _
    $region27: #{tpu_custom_call.1} parent=1 // pred_check_branch
      %46 = sbr.rel (0) target = $region29
    $region28: #{tpu_custom_call.1} parent=1 // pred_region
      _
    $region29: #{tpu_custom_call.1} parent=1 // pred_fallthru
      _
    // Predicated region
    $region30: #{tpu_custom_call.1} parent=1 // pred_check
      _
    $region31: #{tpu_custom_call.1} parent=1 // pred_check_branch
      %48 = sbr.rel (0) target = $region33
    $region32: #{tpu_custom_call.1} parent=1 // pred_region
      %s50 = ssub.s32 512, 512
      %51 = vsyncadd [#allocation6], %s50
      %s52 = sshll.u32 [#allocation5], 4
      %s53 = int_to_ptr.vmem [resolvable:$true] %s52
      %58 = dma.hbm_to_vmem [thread:$0]  %s7, 512, %s53, [#allocation6], 128, 128, 8
    $region33: #{tpu_custom_call.1} parent=1 // pred_fallthru
      _
    // Predicated region
    $region34: #{tpu_custom_call.1} parent=1 // pred_check
      _
    $region35: #{tpu_custom_call.1} parent=1 // pred_check_branch
      %60 = sbr.rel (0) target = $region37
    $region36: #{tpu_custom_call.1} parent=1 // pred_region
      _
    $region37: #{tpu_custom_call.1} parent=1 // pred_fallthru
      _
    // Predicated region
    $region38: #{tpu_custom_call.1} parent=1 // pred_check
      _
    $region39: #{tpu_custom_call.1} parent=1 // pred_check_branch
      %62 = sbr.rel (0) target = $region41
    $region40: #{tpu_custom_call.1} parent=1 // pred_region
      _
    $region41: #{tpu_custom_call.1} parent=1 // pred_fallthru
      _
    // Predicated region
    $region42: #{tpu_custom_call.1} parent=1 // pred_check
      _
    $region43: #{tpu_custom_call.1} parent=1 // pred_check_branch
      %64 = sbr.rel (0) target = $region45
    $region44: #{tpu_custom_call.1} parent=1 // pred_region
      %s66 = ssub.s32 112, 112
      %67 = vsyncadd [#allocation6], %s66
      %s69 = sshll.u32 [#allocation7], 4
      %s70 = int_to_ptr.vmem [resolvable:$true] %s69
      %72 = dma.hbm_to_vmem [thread:$0]  %s10, 112, %s70, [#allocation6]
    $region45: #{tpu_custom_call.1} parent=1 // pred_fallthru
      _
    // Predicated region
    $region46: #{tpu_custom_call.1} parent=1 // pred_check
      _
    $region47: #{tpu_custom_call.1} parent=1 // pred_check_branch
      %74 = sbr.rel (0) target = $region49
    $region48: #{tpu_custom_call.1} parent=1 // pred_region
      %s76 = ssub.s32 6144, 6144
      %77 = vsyncadd [#allocation9], %s76
      %s78 = sshll.u32 [#allocation8], 4
      %s79 = int_to_ptr.vmem [resolvable:$true] %s78
      %84 = dma.hbm_to_vmem [thread:$0]  %s11, 6144, %s79, [#allocation9], 128, 128, 8
    $region49: #{tpu_custom_call.1} parent=1 // pred_fallthru
      _
    // Predicated region
    $region50: #{tpu_custom_call.1} parent=1 // pred_check
      _
    $region51: #{tpu_custom_call.1} parent=1 // pred_check_branch
      %86 = sbr.rel (0) target = $region53
    $region52: #{tpu_custom_call.1} parent=1 // pred_region
      %s88 = ssub.s32 6144, 6144
      %89 = vsyncadd [#allocation9], %s88
      %s90 = sshll.u32 [#allocation10], 4
      %s91 = int_to_ptr.vmem [resolvable:$true] %s90
      %96 = dma.hbm_to_vmem [thread:$0]  %s12, 6144, %s91, [#allocation9], 384, 384, 24
    $region53: #{tpu_custom_call.1} parent=1 // pred_fallthru
      _
    // Predicated region
    $region54: #{tpu_custom_call.1} parent=1 // pred_check
      _
    $region55: #{tpu_custom_call.1} parent=1 // pred_check_branch
      %98 = sbr.rel (0) target = $region57
    $region56: #{tpu_custom_call.1} parent=1 // pred_region
      _
    $region57: #{tpu_custom_call.1} parent=1 // pred_fallthru
      _
    // Predicated region
    $region58: #{tpu_custom_call.1} parent=1 // pred_check
      _
    $region59: #{tpu_custom_call.1} parent=1 // pred_check_branch
      %100 = sbr.rel (0) target = $region61
    $region60: #{tpu_custom_call.1} parent=1 // pred_region
      %s102 = ssub.s32 512, 512
      %103 = vsyncadd [#allocation12], %s102
      %s104 = sshll.u32 [#allocation11], 4
      %s105 = int_to_ptr.vmem [resolvable:$true] %s104
      %110 = dma.hbm_to_vmem [thread:$0]  %s14, 512, %s105, [#allocation12], 128, 128, 8
    $region61: #{tpu_custom_call.1} parent=1 // pred_fallthru
      _
    // Predicated region
    $region62: #{tpu_custom_call.1} parent=1 // pred_check
      _
    $region63: #{tpu_custom_call.1} parent=1 // pred_check_branch
      %112 = sbr.rel (0) target = $region65
    $region64: #{tpu_custom_call.1} parent=1 // pred_region
      %113 = dma.done [#allocation3], 128
    $region65: #{tpu_custom_call.1} parent=1 // pred_fallthru
      _
    // Predicated region
    $region66: #{tpu_custom_call.1} parent=1 // pred_check
      _
    $region67: #{tpu_custom_call.1} parent=1 // pred_check_branch
      %115 = sbr.rel (0) target = $region69
    $region68: #{tpu_custom_call.1} parent=1 // pred_region
      %116 = dma.done [#allocation6], 512
    $region69: #{tpu_custom_call.1} parent=1 // pred_fallthru
      _
    // Predicated region
    $region70: #{tpu_custom_call.1} parent=1 // pred_check
      _
    $region71: #{tpu_custom_call.1} parent=1 // pred_check_branch
      %118 = sbr.rel (0) target = $region73
    $region72: #{tpu_custom_call.1} parent=1 // pred_region
      %119 = dma.done [#allocation6], 112
    $region73: #{tpu_custom_call.1} parent=1 // pred_fallthru
      _
    // Predicated region
    $region74: #{tpu_custom_call.1} parent=1 // pred_check
      _
    $region75: #{tpu_custom_call.1} parent=1 // pred_check_branch
      %121 = sbr.rel (0) target = $region77
    $region76: #{tpu_custom_call.1} parent=1 // pred_region
      %122 = dma.done [#allocation9], 6144
    $region77: #{tpu_custom_call.1} parent=1 // pred_fallthru
      _
    // Predicated region
    $region78: #{tpu_custom_call.1} parent=1 // pred_check
      _
    $region79: #{tpu_custom_call.1} parent=1 // pred_check_branch
      %124 = sbr.rel (0) target = $region81
    $region80: #{tpu_custom_call.1} parent=1 // pred_region
      %125 = dma.done [#allocation9], 6144
    $region81: #{tpu_custom_call.1} parent=1 // pred_fallthru
      _
    // Predicated region
    $region82: #{tpu_custom_call.1} parent=1 // pred_check
      _
    $region83: #{tpu_custom_call.1} parent=1 // pred_check_branch
      %127 = sbr.rel (0) target = $region85
    $region84: #{tpu_custom_call.1} parent=1 // pred_region
      %128 = dma.done [#allocation12], 512
    $region85: #{tpu_custom_call.1} parent=1 // pred_fallthru
      _
    %v129 = vld [vmem:[#allocation2] sm:$0xff]
    %v130 = vld [vmem:[%s1] sm:$0xff]
    %v131 = vld [vmem:[%s1 + $0x8] sm:$0xff]
    %v132 = vld [vmem:[%s1 + $0x10] sm:$0xff]
    %v133 = vld [vmem:[%s1 + $0x18] sm:$0xff]
    %v134 = vld [vmem:[%s2] sm:$0x1]
    %v136 = vlaneseq
    %v137 = vshrl.u32 %v136, 7
    %v138 = vsub.s32 0, %v137
    %v139 = vrot.slane %v134, %v138
    %vm141 = vcmask 261120
    %v143 = vsel %vm141, %v129, 0
    %145 = vmatprep.subr.mxu0 0.0
    %146 = vmatpush1.msra.mxu0 %v130
    %147 = vmatprep.subr.mxu0 0.0
    %148 = vmatpush1.msra.mxu0 %v131
    %149 = vmatprep.subr.mxu0 0.0
    %150 = vmatpush1.msra.mxu0 %v132
    %151 = vmatprep.subr.mxu0 0.0
    %152 = vmatpush1.msra.mxu0 %v133
    %153 = vmatprep.subr.mxu0 0.0
    %154 = vmatpush1.msra.mxu0 0.0
    %155 = vmatprep.subr.mxu0 0.0
    %156 = vmatpush1.msra.mxu0 0.0
    %157 = vmatprep.subr.mxu0 0.0
    %158 = vmatpush1.msra.mxu0 0.0
    %159 = vmatprep.subr.mxu0 0.0
    %160 = vmatpush1.msra.mxu0 0.0
    %161 = vmatprep.subr.mxu0 0.0
    %162 = vmatpush1.msra.mxu0 0.0
    %163 = vmatprep.subr.mxu0 0.0
    %164 = vmatpush1.msra.mxu0 0.0
    %165 = vmatprep.subr.mxu0 0.0
    %166 = vmatpush1.msra.mxu0 0.0
    %167 = vmatprep.subr.mxu0 0.0
    %168 = vmatpush1.msra.mxu0 0.0
    %169 = vmatprep.subr.mxu0 0.0
    %170 = vmatpush1.msra.mxu0 0.0
    %171 = vmatprep.subr.mxu0 0.0
    %172 = vmatpush1.msra.mxu0 0.0
    %173 = vmatprep.subr.mxu0 0.0
    %174 = vmatpush1.msra.mxu0 0.0
    %175 = vmatprep.subr.mxu0 0.0
    %176 = vmatpush1.msra.mxu0 0.0
    %177 = vmatprep.subr.mxu0 0.0
    %178 = vmatpush1.msra.mxu0 0.0
    %179 = vmatprep.subr.mxu0 0.0
    %180 = vmatpush1.msra.mxu0 0.0
    %181 = vmatprep.subr.mxu0 0.0
    %182 = vmatpush1.msra.mxu0 0.0
    %183 = vmatprep.subr.mxu0 0.0
    %184 = vmatpush1.msra.mxu0 0.0
    %185 = vmatprep.subr.mxu0 0.0
    %186 = vmatpush1.msra.mxu0 0.0
    %187 = vmatprep.subr.mxu0 0.0
    %188 = vmatpush1.msra.mxu0 0.0
    %189 = vmatprep.subr.mxu0 0.0
    %190 = vmatpush1.msra.mxu0 0.0
    %191 = vmatprep.subr.mxu0 0.0
    %192 = vmatpush1.msra.mxu0 0.0
    %193 = vmatprep.subr.mxu0 0.0
    %194 = vmatpush1.msra.mxu0 0.0
    %195 = vmatprep.subr.mxu0 0.0
    %196 = vmatpush1.msra.mxu0 0.0
    %197 = vmatprep.subr.mxu0 0.0
    %198 = vmatpush1.msra.mxu0 0.0
    %199 = vmatprep.subr.mxu0 0.0
    %200 = vmatpush1.msra.mxu0 0.0
    %201 = vmatprep.subr.mxu0 0.0
    %202 = vmatpush1.msra.mxu0 0.0
    %203 = vmatprep.subr.mxu0 0.0
    %204 = vmatpush1.msra.mxu0 0.0
    %205 = vmatprep.subr.mxu0 0.0
    %206 = vmatpush1.msra.mxu0 0.0
    %207 = vmatprep.subr.mxu0 0.0
    %208 = vmatpush1.msra.mxu0 0.0
    %209 = vmatprep.mubr.f32.mxu0 0.0
    %210 = vmatmul.mubr.f32.gmra.mrb[0].mxu0 %v143
    %v211 = vpop.f32.mrb[0].mxu0
    %v212 = vadd.f32 %v139, %v211
    %v213 = vpop.f32.mrb[0].mxu0
    %214 = vdwg.mxu0
    %v215 = vmul.f32 %v212, 0.1
    %v216 = vmax.f32 %v212, %v215
    %v217 = vld [vmem:[%s3] sm:$0xff]
    %v218 = vld [vmem:[%s3 + $0x8] sm:$0xff]
    %v219 = vld [vmem:[%s3 + $0x10] sm:$0xff]
    %v220 = vld [vmem:[%s3 + $0x18] sm:$0xff]
    %v221 = vld [vmem:[%s3 + $0x20] sm:$0xff]
    %v222 = vld [vmem:[%s3 + $0x28] sm:$0xff]
    %v223 = vld [vmem:[%s3 + $0x30] sm:$0xff]
    %v224 = vld [vmem:[%s3 + $0x38] sm:$0xff]
    %v225 = vld [vmem:[%s4] sm:$0x1]
    %v227 = vlaneseq
    %v228 = vshrl.u32 %v227, 7
    %v229 = vsub.s32 0, %v228
    %v230 = vrot.slane %v225, %v229
    %vm232 = vcmask 523264
    %v234 = vsel %vm232, %v216, 0
    %236 = vmatprep.subr.mxu0 0.0
    %237 = vmatpush1.msra.mxu0 %v217
    %238 = vmatprep.subr.mxu0 0.0
    %239 = vmatpush1.msra.mxu0 %v218
    %240 = vmatprep.subr.mxu0 0.0
    %241 = vmatpush1.msra.mxu0 %v219
    %242 = vmatprep.subr.mxu0 0.0
    %243 = vmatpush1.msra.mxu0 %v220
    %244 = vmatprep.subr.mxu0 0.0
    %245 = vmatpush1.msra.mxu0 %v221
    %246 = vmatprep.subr.mxu0 0.0
    %247 = vmatpush1.msra.mxu0 %v222
    %248 = vmatprep.subr.mxu0 0.0
    %249 = vmatpush1.msra.mxu0 %v223
    %250 = vmatprep.subr.mxu0 0.0
    %251 = vmatpush1.msra.mxu0 %v224
    %252 = vmatprep.subr.mxu0 0.0
    %253 = vmatpush1.msra.mxu0 0.0
    %254 = vmatprep.subr.mxu0 0.0
    %255 = vmatpush1.msra.mxu0 0.0
    %256 = vmatprep.subr.mxu0 0.0
    %257 = vmatpush1.msra.mxu0 0.0
    %258 = vmatprep.subr.mxu0 0.0
    %259 = vmatpush1.msra.mxu0 0.0
    %260 = vmatprep.subr.mxu0 0.0
    %261 = vmatpush1.msra.mxu0 0.0
    %262 = vmatprep.subr.mxu0 0.0
    %263 = vmatpush1.msra.mxu0 0.0
    %264 = vmatprep.subr.mxu0 0.0
    %265 = vmatpush1.msra.mxu0 0.0
    %266 = vmatprep.subr.mxu0 0.0
    %267 = vmatpush1.msra.mxu0 0.0
    %268 = vmatprep.subr.mxu0 0.0
    %269 = vmatpush1.msra.mxu0 0.0
    %270 = vmatprep.subr.mxu0 0.0
    %271 = vmatpush1.msra.mxu0 0.0
    %272 = vmatprep.subr.mxu0 0.0
    %273 = vmatpush1.msra.mxu0 0.0
    %274 = vmatprep.subr.mxu0 0.0
    %275 = vmatpush1.msra.mxu0 0.0
    %276 = vmatprep.subr.mxu0 0.0
    %277 = vmatpush1.msra.mxu0 0.0
    %278 = vmatprep.subr.mxu0 0.0
    %279 = vmatpush1.msra.mxu0 0.0
    %280 = vmatprep.subr.mxu0 0.0
    %281 = vmatpush1.msra.mxu0 0.0
    %282 = vmatprep.subr.mxu0 0.0
    %283 = vmatpush1.msra.mxu0 0.0
    %284 = vmatprep.subr.mxu0 0.0
    %285 = vmatpush1.msra.mxu0 0.0
    %286 = vmatprep.subr.mxu0 0.0
    %287 = vmatpush1.msra.mxu0 0.0
    %288 = vmatprep.subr.mxu0 0.0
    %289 = vmatpush1.msra.mxu0 0.0
    %290 = vmatprep.subr.mxu0 0.0
    %291 = vmatpush1.msra.mxu0 0.0
    %292 = vmatprep.subr.mxu0 0.0
    %293 = vmatpush1.msra.mxu0 0.0
    %294 = vmatprep.subr.mxu0 0.0
    %295 = vmatpush1.msra.mxu0 0.0
    %296 = vmatprep.subr.mxu0 0.0
    %297 = vmatpush1.msra.mxu0 0.0
    %298 = vmatprep.subr.mxu0 0.0
    %299 = vmatpush1.msra.mxu0 0.0
    %300 = vmatprep.mubr.f32.mxu0 0.0
    %301 = vmatmul.mubr.f32.gmra.mrb[0].mxu0 %v234
    %v302 = vpop.f32.mrb[0].mxu0
    %v303 = vadd.f32 %v230, %v302
    %v304 = vpop.f32.mrb[0].mxu0
    %305 = vdwg.mxu0
    %v306 = vmul.f32 %v303, 0.1
    %v307 = vmax.f32 %v303, %v306
    %v308 = vld [vmem:[%s5] sm:$0xff]
    %v309 = vld [vmem:[%s5 + $0x8] sm:$0xff]
    %v310 = vld [vmem:[%s5 + $0x10] sm:$0xff]
    %v311 = vld [vmem:[%s5 + $0x18] sm:$0xff]
    %v312 = vld [vmem:[%s5 + $0x20] sm:$0xff]
    %v313 = vld [vmem:[%s5 + $0x28] sm:$0xff]
    %v314 = vld [vmem:[%s5 + $0x30] sm:$0xff]
    %v315 = vld [vmem:[%s5 + $0x38] sm:$0xff]
    %v316 = vld [vmem:[%s5 + $0x40] sm:$0xff]
    %v317 = vld [vmem:[%s5 + $0x48] sm:$0xff]
    %v318 = vld [vmem:[%s5 + $0x50] sm:$0xff]
    %v319 = vld [vmem:[%s5 + $0x58] sm:$0xff]
    %v320 = vld [vmem:[%s5 + $0x60] sm:$0xff]
    %v321 = vld [vmem:[%s5 + $0x68] sm:$0xff]
    %v322 = vld [vmem:[%s5 + $0x70] sm:$0xff]
    %v323 = vld [vmem:[%s5 + $0x78] sm:$0xff]
    %v324 = vld [vmem:[%s6] sm:$0x1]
    %v326 = vlaneseq
    %v327 = vshrl.u32 %v326, 7
    %v328 = vsub.s32 0, %v327
    %v329 = vrot.slane %v324, %v328
    %331 = vmatprep.subr.mxu0 0.0
    %332 = vmatpush1.msra.mxu0 %v308
    %333 = vmatprep.subr.mxu0 0.0
    %334 = vmatpush1.msra.mxu0 %v309
    %335 = vmatprep.subr.mxu0 0.0
    %336 = vmatpush1.msra.mxu0 %v310
    %337 = vmatprep.subr.mxu0 0.0
    %338 = vmatpush1.msra.mxu0 %v311
    %339 = vmatprep.subr.mxu0 0.0
    %340 = vmatpush1.msra.mxu0 %v312
    %341 = vmatprep.subr.mxu0 0.0
    %342 = vmatpush1.msra.mxu0 %v313
    %343 = vmatprep.subr.mxu0 0.0
    %344 = vmatpush1.msra.mxu0 %v314
    %345 = vmatprep.subr.mxu0 0.0
    %346 = vmatpush1.msra.mxu0 %v315
    %347 = vmatprep.subr.mxu0 0.0
    %348 = vmatpush1.msra.mxu0 %v316
    %349 = vmatprep.subr.mxu0 0.0
    %350 = vmatpush1.msra.mxu0 %v317
    %351 = vmatprep.subr.mxu0 0.0
    %352 = vmatpush1.msra.mxu0 %v318
    %353 = vmatprep.subr.mxu0 0.0
    %354 = vmatpush1.msra.mxu0 %v319
    %355 = vmatprep.subr.mxu0 0.0
    %356 = vmatpush1.msra.mxu0 %v320
    %357 = vmatprep.subr.mxu0 0.0
    %358 = vmatpush1.msra.mxu0 %v321
    %359 = vmatprep.subr.mxu0 0.0
    %360 = vmatpush1.msra.mxu0 %v322
    %361 = vmatprep.subr.mxu0 0.0
    %362 = vmatpush1.msra.mxu0 %v323
    %363 = vmatprep.subr.mxu0 0.0
    %364 = vmatpush1.msra.mxu0 0.0
    %365 = vmatprep.subr.mxu0 0.0
    %366 = vmatpush1.msra.mxu0 0.0
    %367 = vmatprep.subr.mxu0 0.0
    %368 = vmatpush1.msra.mxu0 0.0
    %369 = vmatprep.subr.mxu0 0.0
    %370 = vmatpush1.msra.mxu0 0.0
    %371 = vmatprep.subr.mxu0 0.0
    %372 = vmatpush1.msra.mxu0 0.0
    %373 = vmatprep.subr.mxu0 0.0
    %374 = vmatpush1.msra.mxu0 0.0
    %375 = vmatprep.subr.mxu0 0.0
    %376 = vmatpush1.msra.mxu0 0.0
    %377 = vmatprep.subr.mxu0 0.0
    %378 = vmatpush1.msra.mxu0 0.0
    %379 = vmatprep.subr.mxu0 0.0
    %380 = vmatpush1.msra.mxu0 0.0
    %381 = vmatprep.subr.mxu0 0.0
    %382 = vmatpush1.msra.mxu0 0.0
    %383 = vmatprep.subr.mxu0 0.0
    %384 = vmatpush1.msra.mxu0 0.0
    %385 = vmatprep.subr.mxu0 0.0
    %386 = vmatpush1.msra.mxu0 0.0
    %387 = vmatprep.subr.mxu0 0.0
    %388 = vmatpush1.msra.mxu0 0.0
    %389 = vmatprep.subr.mxu0 0.0
    %390 = vmatpush1.msra.mxu0 0.0
    %391 = vmatprep.subr.mxu0 0.0
    %392 = vmatpush1.msra.mxu0 0.0
    %393 = vmatprep.subr.mxu0 0.0
    %394 = vmatpush1.msra.mxu0 0.0
    %395 = vmatprep.mubr.f32.mxu0 0.0
    %396 = vmatmul.mubr.f32.gmra.mrb[0].mxu0 %v307
    %v397 = vpop.f32.mrb[0].mxu0
    %v398 = vadd.f32 %v329, %v397
    %v399 = vpop.f32.mrb[0].mxu0
    %400 = vdwg.mxu0
    %v401 = vmul.f32 %v398, 0.1
    %v402 = vmax.f32 %v398, %v401
    %v403 = vld [vmem:[#allocation5] sm:$0xff]
    %v404 = vld [vmem:[#allocation5 + $0x8] sm:$0xff]
    %v405 = vld [vmem:[#allocation5 + $0x10] sm:$0xff]
    %v406 = vld [vmem:[#allocation5 + $0x18] sm:$0xff]
    %v407 = vld [vmem:[%s8] sm:$0x1]
    %v409 = vlaneseq
    %v410 = vshrl.u32 %v409, 7
    %v411 = vsub.s32 0, %v410
    %v412 = vrot.slane %v407, %v411
    %v415 = vsel %vm141, %v402, 0
    %417 = vmatprep.subr.mxu0 0.0
    %418 = vmatpush1.msra.mxu0 %v403
    %419 = vmatprep.subr.mxu0 0.0
    %420 = vmatpush1.msra.mxu0 %v404
    %421 = vmatprep.subr.mxu0 0.0
    %422 = vmatpush1.msra.mxu0 %v405
    %423 = vmatprep.subr.mxu0 0.0
    %424 = vmatpush1.msra.mxu0 %v406
    %425 = vmatprep.subr.mxu0 0.0
    %426 = vmatpush1.msra.mxu0 0.0
    %427 = vmatprep.subr.mxu0 0.0
    %428 = vmatpush1.msra.mxu0 0.0
    %429 = vmatprep.subr.mxu0 0.0
    %430 = vmatpush1.msra.mxu0 0.0
    %431 = vmatprep.subr.mxu0 0.0
    %432 = vmatpush1.msra.mxu0 0.0
    %433 = vmatprep.subr.mxu0 0.0
    %434 = vmatpush1.msra.mxu0 0.0
    %435 = vmatprep.subr.mxu0 0.0
    %436 = vmatpush1.msra.mxu0 0.0
    %437 = vmatprep.subr.mxu0 0.0
    %438 = vmatpush1.msra.mxu0 0.0
    %439 = vmatprep.subr.mxu0 0.0
    %440 = vmatpush1.msra.mxu0 0.0
    %441 = vmatprep.subr.mxu0 0.0
    %442 = vmatpush1.msra.mxu0 0.0
    %443 = vmatprep.subr.mxu0 0.0
    %444 = vmatpush1.msra.mxu0 0.0
    %445 = vmatprep.subr.mxu0 0.0
    %446 = vmatpush1.msra.mxu0 0.0
    %447 = vmatprep.subr.mxu0 0.0
    %448 = vmatpush1.msra.mxu0 0.0
    %449 = vmatprep.subr.mxu0 0.0
    %450 = vmatpush1.msra.mxu0 0.0
    %451 = vmatprep.subr.mxu0 0.0
    %452 = vmatpush1.msra.mxu0 0.0
    %453 = vmatprep.subr.mxu0 0.0
    %454 = vmatpush1.msra.mxu0 0.0
    %455 = vmatprep.subr.mxu0 0.0
    %456 = vmatpush1.msra.mxu0 0.0
    %457 = vmatprep.subr.mxu0 0.0
    %458 = vmatpush1.msra.mxu0 0.0
    %459 = vmatprep.subr.mxu0 0.0
    %460 = vmatpush1.msra.mxu0 0.0
    %461 = vmatprep.subr.mxu0 0.0
    %462 = vmatpush1.msra.mxu0 0.0
    %463 = vmatprep.subr.mxu0 0.0
    %464 = vmatpush1.msra.mxu0 0.0
    %465 = vmatprep.subr.mxu0 0.0
    %466 = vmatpush1.msra.mxu0 0.0
    %467 = vmatprep.subr.mxu0 0.0
    %468 = vmatpush1.msra.mxu0 0.0
    %469 = vmatprep.subr.mxu0 0.0
    %470 = vmatpush1.msra.mxu0 0.0
    %471 = vmatprep.subr.mxu0 0.0
    %472 = vmatpush1.msra.mxu0 0.0
    %473 = vmatprep.subr.mxu0 0.0
    %474 = vmatpush1.msra.mxu0 0.0
    %475 = vmatprep.subr.mxu0 0.0
    %476 = vmatpush1.msra.mxu0 0.0
    %477 = vmatprep.subr.mxu0 0.0
    %478 = vmatpush1.msra.mxu0 0.0
    %479 = vmatprep.subr.mxu0 0.0
    %480 = vmatpush1.msra.mxu0 0.0
    %481 = vmatprep.mubr.f32.mxu0 0.0
    %482 = vmatmul.mubr.f32.gmra.mrb[0].mxu0 %v415
    %v483 = vpop.f32.mrb[0].mxu0
    %v484 = vadd.f32 %v412, %v483
    %v485 = vpop.f32.mrb[0].mxu0
    %486 = vdwg.mxu0
    %v487 = vmul.f32 %v484, 0.1
    %v488 = vmax.f32 %v484, %v487
    %v489 = vld [vmem:[%s9] sm:$0xff]
    %v490 = vld [vmem:[%s9 + $0x8] sm:$0xff]
    %v491 = vld [vmem:[%s9 + $0x10] sm:$0xff]
    %v492 = vld [vmem:[%s9 + $0x18] sm:$0xff]
    %v493 = vld [vmem:[%s9 + $0x20] sm:$0xff]
    %v494 = vld [vmem:[%s9 + $0x28] sm:$0xff]
    %v495 = vld [vmem:[%s9 + $0x30] sm:$0xff]
    %v496 = vld [vmem:[%s9 + $0x38] sm:$0xff]
    %v497 = vld [vmem:[%s9 + $0x40] sm:$0xff]
    %v498 = vld [vmem:[%s9 + $0x48] sm:$0xff]
    %v499 = vld [vmem:[%s9 + $0x50] sm:$0xff]
    %v500 = vld [vmem:[%s9 + $0x58] sm:$0xff]
    %v501 = vld [vmem:[%s9 + $0x60] sm:$0xff]
    %v502 = vld [vmem:[%s9 + $0x68] sm:$0xff]
    %v503 = vld [vmem:[%s9 + $0x70] sm:$0xff]
    %v504 = vld [vmem:[%s9 + $0x78] sm:$0xff]
    %v505 = vld [vmem:[%s9 + $0x80] sm:$0xff]
    %v506 = vld [vmem:[%s9 + $0x88] sm:$0xff]
    %v507 = vld [vmem:[%s9 + $0x90] sm:$0xff]
    %v508 = vld [vmem:[%s9 + $0x98] sm:$0xff]
    %v509 = vld [vmem:[%s9 + $0xa0] sm:$0xff]
    %v510 = vld [vmem:[%s9 + $0xa8] sm:$0xff]
    %v511 = vld [vmem:[%s9 + $0xb0] sm:$0xff]
    %v512 = vld [vmem:[%s9 + $0xb8] sm:$0xff]
    %v513 = vld [vmem:[%s9 + $0xc0] sm:$0xff]
    %v514 = vld [vmem:[%s9 + $0xc8] sm:$0xff]
    %v515 = vld [vmem:[%s9 + $0xd0] sm:$0xff]
    %v516 = vld [vmem:[%s9 + $0xd8] sm:$0xff]
    %v517 = vld [vmem:[#allocation7] sm:$0xff]
    %v519 = vlaneseq
    %v520 = vshrl.u32 %v519, 7
    %v521 = vsub.s32 0, %v520
    %v522 = vrot.slane %v517, %v521
    %v523 = vlaneseq
    %v524 = vshrl.u32 %v523, 7
    %v525 = vsub.s32 1, %v524
    %v526 = vrot.slane %v517, %v525
    %v527 = vlaneseq
    %v528 = vshrl.u32 %v527, 7
    %v529 = vsub.s32 2, %v528
    %v530 = vrot.slane %v517, %v529
    %v531 = vlaneseq
    %v532 = vshrl.u32 %v531, 7
    %v533 = vsub.s32 3, %v532
    %v534 = vrot.slane %v517, %v533
    %v535 = vlaneseq
    %v536 = vshrl.u32 %v535, 7
    %v537 = vsub.s32 4, %v536
    %v538 = vrot.slane %v517, %v537
    %v539 = vlaneseq
    %v540 = vshrl.u32 %v539, 7
    %v541 = vsub.s32 5, %v540
    %v542 = vrot.slane %v517, %v541
    %v543 = vlaneseq
    %v544 = vshrl.u32 %v543, 7
    %v545 = vsub.s32 6, %v544
    %v546 = vrot.slane %v517, %v545
    %v555 = vsel %vm141, %v488, 0
    %557 = vmatprep.subr.mxu0 %v490
    %558 = vmatpush1.msra.mxu0 %v489
    %559 = vmatprep.subr.mxu0 %v497
    %560 = vmatpush1.msra.mxu0 %v496
    %561 = vmatprep.subr.mxu0 %v504
    %562 = vmatpush1.msra.mxu0 %v503
    %563 = vmatprep.subr.mxu0 %v511
    %564 = vmatpush1.msra.mxu0 %v510
    %565 = vmatprep.subr.mxu0 0.0
    %566 = vmatpush1.msra.mxu0 0.0
    %567 = vmatprep.subr.mxu0 0.0
    %568 = vmatpush1.msra.mxu0 0.0
    %569 = vmatprep.subr.mxu0 0.0
    %570 = vmatpush1.msra.mxu0 0.0
    %571 = vmatprep.subr.mxu0 0.0
    %572 = vmatpush1.msra.mxu0 0.0
    %573 = vmatprep.subr.mxu0 0.0
    %574 = vmatpush1.msra.mxu0 0.0
    %575 = vmatprep.subr.mxu0 0.0
    %576 = vmatpush1.msra.mxu0 0.0
    %577 = vmatprep.subr.mxu0 0.0
    %578 = vmatpush1.msra.mxu0 0.0
    %579 = vmatprep.subr.mxu0 0.0
    %580 = vmatpush1.msra.mxu0 0.0
    %581 = vmatprep.subr.mxu0 0.0
    %582 = vmatpush1.msra.mxu0 0.0
    %583 = vmatprep.subr.mxu0 0.0
    %584 = vmatpush1.msra.mxu0 0.0
    %585 = vmatprep.subr.mxu0 0.0
    %586 = vmatpush1.msra.mxu0 0.0
    %587 = vmatprep.subr.mxu0 0.0
    %588 = vmatpush1.msra.mxu0 0.0
    %589 = vmatprep.subr.mxu0 0.0
    %590 = vmatpush1.msra.mxu0 0.0
    %591 = vmatprep.subr.mxu0 0.0
    %592 = vmatpush1.msra.mxu0 0.0
    %593 = vmatprep.subr.mxu0 0.0
    %594 = vmatpush1.msra.mxu0 0.0
    %595 = vmatprep.subr.mxu0 0.0
    %596 = vmatpush1.msra.mxu0 0.0
    %597 = vmatprep.subr.mxu0 0.0
    %598 = vmatpush1.msra.mxu0 0.0
    %599 = vmatprep.subr.mxu0 0.0
    %600 = vmatpush1.msra.mxu0 0.0
    %601 = vmatprep.subr.mxu0 0.0
    %602 = vmatpush1.msra.mxu0 0.0
    %603 = vmatprep.subr.mxu0 0.0
    %604 = vmatpush1.msra.mxu0 0.0
    %605 = vmatprep.subr.mxu0 0.0
    %606 = vmatpush1.msra.mxu0 0.0
    %607 = vmatprep.subr.mxu0 0.0
    %608 = vmatpush1.msra.mxu0 0.0
    %609 = vmatprep.subr.mxu0 0.0
    %610 = vmatpush1.msra.mxu0 0.0
    %611 = vmatprep.subr.mxu0 0.0
    %612 = vmatpush1.msra.mxu0 0.0
    %613 = vmatprep.subr.mxu0 0.0
    %614 = vmatpush1.msra.mxu0 0.0
    %615 = vmatprep.subr.mxu0 0.0
    %616 = vmatpush1.msra.mxu0 0.0
    %617 = vmatprep.subr.mxu0 0.0
    %618 = vmatpush1.msra.mxu0 0.0
    %619 = vmatprep.subr.mxu0 0.0
    %620 = vmatpush1.msra.mxu0 0.0
    %621 = vmatprep.mubr.f32.mxu0 0.0
    %622 = vmatmul.mubr.f32.gmra.mrb[0].mxu0 %v555
    %v623 = vpop.f32.mrb[0].mxu0
    %v624 = vadd.f32 %v522, %v623
    %v625 = vpop.f32.mrb[0].mxu0
    %v626 = vadd.f32 %v526, %v625
    %627 = vdwg.mxu0
    %628 = vmatprep.subr.mxu0 %v492
    %629 = vmatpush1.msra.mxu0 %v491
    %630 = vmatprep.subr.mxu0 %v499
    %631 = vmatpush1.msra.mxu0 %v498
    %632 = vmatprep.subr.mxu0 %v506
    %633 = vmatpush1.msra.mxu0 %v505
    %634 = vmatprep.subr.mxu0 %v513
    %635 = vmatpush1.msra.mxu0 %v512
    %636 = vmatprep.subr.mxu0 0.0
    %637 = vmatpush1.msra.mxu0 0.0
    %638 = vmatprep.subr.mxu0 0.0
    %639 = vmatpush1.msra.mxu0 0.0
    %640 = vmatprep.subr.mxu0 0.0
    %641 = vmatpush1.msra.mxu0 0.0
    %642 = vmatprep.subr.mxu0 0.0
    %643 = vmatpush1.msra.mxu0 0.0
    %644 = vmatprep.subr.mxu0 0.0
    %645 = vmatpush1.msra.mxu0 0.0
    %646 = vmatprep.subr.mxu0 0.0
    %647 = vmatpush1.msra.mxu0 0.0
    %648 = vmatprep.subr.mxu0 0.0
    %649 = vmatpush1.msra.mxu0 0.0
    %650 = vmatprep.subr.mxu0 0.0
    %651 = vmatpush1.msra.mxu0 0.0
    %652 = vmatprep.subr.mxu0 0.0
    %653 = vmatpush1.msra.mxu0 0.0
    %654 = vmatprep.subr.mxu0 0.0
    %655 = vmatpush1.msra.mxu0 0.0
    %656 = vmatprep.subr.mxu0 0.0
    %657 = vmatpush1.msra.mxu0 0.0
    %658 = vmatprep.subr.mxu0 0.0
    %659 = vmatpush1.msra.mxu0 0.0
    %660 = vmatprep.subr.mxu0 0.0
    %661 = vmatpush1.msra.mxu0 0.0
    %662 = vmatprep.subr.mxu0 0.0
    %663 = vmatpush1.msra.mxu0 0.0
    %664 = vmatprep.subr.mxu0 0.0
    %665 = vmatpush1.msra.mxu0 0.0
    %666 = vmatprep.subr.mxu0 0.0
    %667 = vmatpush1.msra.mxu0 0.0
    %668 = vmatprep.subr.mxu0 0.0
    %669 = vmatpush1.msra.mxu0 0.0
    %670 = vmatprep.subr.mxu0 0.0
    %671 = vmatpush1.msra.mxu0 0.0
    %672 = vmatprep.subr.mxu0 0.0
    %673 = vmatpush1.msra.mxu0 0.0
    %674 = vmatprep.subr.mxu0 0.0
    %675 = vmatpush1.msra.mxu0 0.0
    %676 = vmatprep.subr.mxu0 0.0
    %677 = vmatpush1.msra.mxu0 0.0
    %678 = vmatprep.subr.mxu0 0.0
    %679 = vmatpush1.msra.mxu0 0.0
    %680 = vmatprep.subr.mxu0 0.0
    %681 = vmatpush1.msra.mxu0 0.0
    %682 = vmatprep.subr.mxu0 0.0
    %683 = vmatpush1.msra.mxu0 0.0
    %684 = vmatprep.subr.mxu0 0.0
    %685 = vmatpush1.msra.mxu0 0.0
    %686 = vmatprep.subr.mxu0 0.0
    %687 = vmatpush1.msra.mxu0 0.0
    %688 = vmatprep.subr.mxu0 0.0
    %689 = vmatpush1.msra.mxu0 0.0
    %690 = vmatprep.subr.mxu0 0.0
    %691 = vmatpush1.msra.mxu0 0.0
    %692 = vmatprep.mubr.f32.mxu0 0.0
    %693 = vmatmul.mubr.f32.gmra.mrb[0].mxu0 %v555
    %v694 = vpop.f32.mrb[0].mxu0
    %v695 = vadd.f32 %v530, %v694
    %v696 = vpop.f32.mrb[0].mxu0
    %v697 = vadd.f32 %v534, %v696
    %698 = vdwg.mxu0
    %699 = vmatprep.subr.mxu0 %v494
    %700 = vmatpush1.msra.mxu0 %v493
    %701 = vmatprep.subr.mxu0 %v501
    %702 = vmatpush1.msra.mxu0 %v500
    %703 = vmatprep.subr.mxu0 %v508
    %704 = vmatpush1.msra.mxu0 %v507
    %705 = vmatprep.subr.mxu0 %v515
    %706 = vmatpush1.msra.mxu0 %v514
    %707 = vmatprep.subr.mxu0 0.0
    %708 = vmatpush1.msra.mxu0 0.0
    %709 = vmatprep.subr.mxu0 0.0
    %710 = vmatpush1.msra.mxu0 0.0
    %711 = vmatprep.subr.mxu0 0.0
    %712 = vmatpush1.msra.mxu0 0.0
    %713 = vmatprep.subr.mxu0 0.0
    %714 = vmatpush1.msra.mxu0 0.0
    %715 = vmatprep.subr.mxu0 0.0
    %716 = vmatpush1.msra.mxu0 0.0
    %717 = vmatprep.subr.mxu0 0.0
    %718 = vmatpush1.msra.mxu0 0.0
    %719 = vmatprep.subr.mxu0 0.0
    %720 = vmatpush1.msra.mxu0 0.0
    %721 = vmatprep.subr.mxu0 0.0
    %722 = vmatpush1.msra.mxu0 0.0
    %723 = vmatprep.subr.mxu0 0.0
    %724 = vmatpush1.msra.mxu0 0.0
    %725 = vmatprep.subr.mxu0 0.0
    %726 = vmatpush1.msra.mxu0 0.0
    %727 = vmatprep.subr.mxu0 0.0
    %728 = vmatpush1.msra.mxu0 0.0
    %729 = vmatprep.subr.mxu0 0.0
    %730 = vmatpush1.msra.mxu0 0.0
    %731 = vmatprep.subr.mxu0 0.0
    %732 = vmatpush1.msra.mxu0 0.0
    %733 = vmatprep.subr.mxu0 0.0
    %734 = vmatpush1.msra.mxu0 0.0
    %735 = vmatprep.subr.mxu0 0.0
    %736 = vmatpush1.msra.mxu0 0.0
    %737 = vmatprep.subr.mxu0 0.0
    %738 = vmatpush1.msra.mxu0 0.0
    %739 = vmatprep.subr.mxu0 0.0
    %740 = vmatpush1.msra.mxu0 0.0
    %741 = vmatprep.subr.mxu0 0.0
    %742 = vmatpush1.msra.mxu0 0.0
    %743 = vmatprep.subr.mxu0 0.0
    %744 = vmatpush1.msra.mxu0 0.0
    %745 = vmatprep.subr.mxu0 0.0
    %746 = vmatpush1.msra.mxu0 0.0
    %747 = vmatprep.subr.mxu0 0.0
    %748 = vmatpush1.msra.mxu0 0.0
    %749 = vmatprep.subr.mxu0 0.0
    %750 = vmatpush1.msra.mxu0 0.0
    %751 = vmatprep.subr.mxu0 0.0
    %752 = vmatpush1.msra.mxu0 0.0
    %753 = vmatprep.subr.mxu0 0.0
    %754 = vmatpush1.msra.mxu0 0.0
    %755 = vmatprep.subr.mxu0 0.0
    %756 = vmatpush1.msra.mxu0 0.0
    %757 = vmatprep.subr.mxu0 0.0
    %758 = vmatpush1.msra.mxu0 0.0
    %759 = vmatprep.subr.mxu0 0.0
    %760 = vmatpush1.msra.mxu0 0.0
    %761 = vmatprep.subr.mxu0 0.0
    %762 = vmatpush1.msra.mxu0 0.0
    %763 = vmatprep.mubr.f32.mxu0 0.0
    %764 = vmatmul.mubr.f32.gmra.mrb[0].mxu0 %v555
    %v765 = vpop.f32.mrb[0].mxu0
    %v766 = vadd.f32 %v538, %v765
    %v767 = vpop.f32.mrb[0].mxu0
    %v768 = vadd.f32 %v542, %v767
    %769 = vdwg.mxu0
    %770 = vmatprep.subr.mxu0 0.0
    %771 = vmatpush1.msra.mxu0 %v495
    %772 = vmatprep.subr.mxu0 0.0
    %773 = vmatpush1.msra.mxu0 %v502
    %774 = vmatprep.subr.mxu0 0.0
    %775 = vmatpush1.msra.mxu0 %v509
    %776 = vmatprep.subr.mxu0 0.0
    %777 = vmatpush1.msra.mxu0 %v516
    %778 = vmatprep.subr.mxu0 0.0
    %779 = vmatpush1.msra.mxu0 0.0
    %780 = vmatprep.subr.mxu0 0.0
    %781 = vmatpush1.msra.mxu0 0.0
    %782 = vmatprep.subr.mxu0 0.0
    %783 = vmatpush1.msra.mxu0 0.0
    %784 = vmatprep.subr.mxu0 0.0
    %785 = vmatpush1.msra.mxu0 0.0
    %786 = vmatprep.subr.mxu0 0.0
    %787 = vmatpush1.msra.mxu0 0.0
    %788 = vmatprep.subr.mxu0 0.0
    %789 = vmatpush1.msra.mxu0 0.0
    %790 = vmatprep.subr.mxu0 0.0
    %791 = vmatpush1.msra.mxu0 0.0
    %792 = vmatprep.subr.mxu0 0.0
    %793 = vmatpush1.msra.mxu0 0.0
    %794 = vmatprep.subr.mxu0 0.0
    %795 = vmatpush1.msra.mxu0 0.0
    %796 = vmatprep.subr.mxu0 0.0
    %797 = vmatpush1.msra.mxu0 0.0
    %798 = vmatprep.subr.mxu0 0.0
    %799 = vmatpush1.msra.mxu0 0.0
    %800 = vmatprep.subr.mxu0 0.0
    %801 = vmatpush1.msra.mxu0 0.0
    %802 = vmatprep.subr.mxu0 0.0
    %803 = vmatpush1.msra.mxu0 0.0
    %804 = vmatprep.subr.mxu0 0.0
    %805 = vmatpush1.msra.mxu0 0.0
    %806 = vmatprep.subr.mxu0 0.0
    %807 = vmatpush1.msra.mxu0 0.0
    %808 = vmatprep.subr.mxu0 0.0
    %809 = vmatpush1.msra.mxu0 0.0
    %810 = vmatprep.subr.mxu0 0.0
    %811 = vmatpush1.msra.mxu0 0.0
    %812 = vmatprep.subr.mxu0 0.0
    %813 = vmatpush1.msra.mxu0 0.0
    %814 = vmatprep.subr.mxu0 0.0
    %815 = vmatpush1.msra.mxu0 0.0
    %816 = vmatprep.subr.mxu0 0.0
    %817 = vmatpush1.msra.mxu0 0.0
    %818 = vmatprep.subr.mxu0 0.0
    %819 = vmatpush1.msra.mxu0 0.0
    %820 = vmatprep.subr.mxu0 0.0
    %821 = vmatpush1.msra.mxu0 0.0
    %822 = vmatprep.subr.mxu0 0.0
    %823 = vmatpush1.msra.mxu0 0.0
    %824 = vmatprep.subr.mxu0 0.0
    %825 = vmatpush1.msra.mxu0 0.0
    %826 = vmatprep.subr.mxu0 0.0
    %827 = vmatpush1.msra.mxu0 0.0
    %828 = vmatprep.subr.mxu0 0.0
    %829 = vmatpush1.msra.mxu0 0.0
    %830 = vmatprep.subr.mxu0 0.0
    %831 = vmatpush1.msra.mxu0 0.0
    %832 = vmatprep.subr.mxu0 0.0
    %833 = vmatpush1.msra.mxu0 0.0
    %834 = vmatprep.mubr.f32.mxu0 0.0
    %835 = vmatmul.mubr.f32.gmra.mrb[0].mxu0 %v555
    %v836 = vpop.f32.mrb[0].mxu0
    %v837 = vadd.f32 %v546, %v836
    %v838 = vpop.f32.mrb[0].mxu0
    %839 = vdwg.mxu0
    %v840 = vmul.f32 %v624, 0.1
    %v841 = vmul.f32 %v626, 0.1
    %v842 = vmul.f32 %v695, 0.1
    %v843 = vmul.f32 %v697, 0.1
    %v844 = vmul.f32 %v766, 0.1
    %v845 = vmul.f32 %v768, 0.1
    %v846 = vmul.f32 %v837, 0.1
    %v847 = vmax.f32 %v624, %v840
    %v848 = vmax.f32 %v626, %v841
    %v849 = vmax.f32 %v695, %v842
    %v850 = vmax.f32 %v697, %v843
    %v851 = vmax.f32 %v766, %v844
    %v852 = vmax.f32 %v768, %v845
    %v853 = vmax.f32 %v837, %v846
    %v854 = vadd.f32 %v848, %v851
    %v855 = vadd.f32 %v849, %v852
    %v856 = vadd.f32 %v850, %v853
    %v857 = vmul.f32 %v854, 0.5
    %v858 = vmul.f32 %v855, 0.5
    %v859 = vmul.f32 %v856, 0.5
    %v860 = vmax.f32 %v857, %v858
    %v861 = vmax.f32 %v860, %v859
    %862 = vmax.xlane.f32.xlu0 %v861
    %v863 = vpop.xlane.xlu0 %862
    %v864 = vsub.f32 %v857, %v863
    %v865 = vsub.f32 %v858, %v863
    %v866 = vsub.f32 %v859, %v863
    %v867 = vmul.f32 %v864, 1.442695
    %v868 = vpow.pop %v867
    %v869 = vmul.f32 %v865, 1.442695
    %v870 = vpow.pop %v869
    %v871 = vmul.f32 %v866, 1.442695
    %v872 = vpow.pop %v871
    %v873 = vld [vmem:[#allocation8] sm:$0xff]
    %v874 = vld [vmem:[#allocation8 + $0x8] sm:$0xff]
    %v875 = vld [vmem:[#allocation8 + $0x10] sm:$0xff]
    %v876 = vld [vmem:[#allocation8 + $0x18] sm:$0xff]
    %v877 = vld [vmem:[#allocation8 + $0x20] sm:$0xff]
    %v878 = vld [vmem:[#allocation8 + $0x28] sm:$0xff]
    %v879 = vld [vmem:[#allocation8 + $0x30] sm:$0xff]
    %v880 = vld [vmem:[#allocation8 + $0x38] sm:$0xff]
    %v881 = vld [vmem:[#allocation8 + $0x40] sm:$0xff]
    %v882 = vld [vmem:[#allocation8 + $0x48] sm:$0xff]
    %v883 = vld [vmem:[#allocation8 + $0x50] sm:$0xff]
    %v884 = vld [vmem:[#allocation8 + $0x58] sm:$0xff]
    %v885 = vld [vmem:[#allocation8 + $0x60] sm:$0xff]
    %v886 = vld [vmem:[#allocation8 + $0x68] sm:$0xff]
    %v887 = vld [vmem:[#allocation8 + $0x70] sm:$0xff]
    %v888 = vld [vmem:[#allocation8 + $0x78] sm:$0xff]
    %v889 = vld [vmem:[#allocation8 + $0x80] sm:$0xff]
    %v890 = vld [vmem:[#allocation8 + $0x88] sm:$0xff]
    %v891 = vld [vmem:[#allocation8 + $0x90] sm:$0xff]
    %v892 = vld [vmem:[#allocation8 + $0x98] sm:$0xff]
    %v893 = vld [vmem:[#allocation8 + $0xa0] sm:$0xff]
    %v894 = vld [vmem:[#allocation8 + $0xa8] sm:$0xff]
    %v895 = vld [vmem:[#allocation8 + $0xb0] sm:$0xff]
    %v896 = vld [vmem:[#allocation8 + $0xb8] sm:$0xff]
    %v897 = vld [vmem:[#allocation8 + $0xc0] sm:$0xff]
    %v898 = vld [vmem:[#allocation8 + $0xc8] sm:$0xff]
    %v899 = vld [vmem:[#allocation8 + $0xd0] sm:$0xff]
    %v900 = vld [vmem:[#allocation8 + $0xd8] sm:$0xff]
    %v901 = vld [vmem:[#allocation8 + $0xe0] sm:$0xff]
    %v902 = vld [vmem:[#allocation8 + $0xe8] sm:$0xff]
    %v903 = vld [vmem:[#allocation8 + $0xf0] sm:$0xff]
    %v904 = vld [vmem:[#allocation8 + $0xf8] sm:$0xff]
    %v905 = vld [vmem:[#allocation8 + $0x100] sm:$0xff]
    %v906 = vld [vmem:[#allocation8 + $0x108] sm:$0xff]
    %v907 = vld [vmem:[#allocation8 + $0x110] sm:$0xff]
    %v908 = vld [vmem:[#allocation8 + $0x118] sm:$0xff]
    %v909 = vld [vmem:[#allocation8 + $0x120] sm:$0xff]
    %v910 = vld [vmem:[#allocation8 + $0x128] sm:$0xff]
    %v911 = vld [vmem:[#allocation8 + $0x130] sm:$0xff]
    %v912 = vld [vmem:[#allocation8 + $0x138] sm:$0xff]
    %v913 = vld [vmem:[#allocation8 + $0x140] sm:$0xff]
    %v914 = vld [vmem:[#allocation8 + $0x148] sm:$0xff]
    %v915 = vld [vmem:[#allocation8 + $0x150] sm:$0xff]
    %v916 = vld [vmem:[#allocation8 + $0x158] sm:$0xff]
    %v917 = vld [vmem:[#allocation8 + $0x160] sm:$0xff]
    %v918 = vld [vmem:[#allocation8 + $0x168] sm:$0xff]
    %v919 = vld [vmem:[#allocation8 + $0x170] sm:$0xff]
    %v920 = vld [vmem:[#allocation8 + $0x178] sm:$0xff]
    %921 = vmatprep.subr.mxu0 0.0
    %922 = vmatpush1.msra.mxu0 %v873
    %923 = vmatprep.subr.mxu0 0.0
    %924 = vmatpush1.msra.mxu0 %v874
    %925 = vmatprep.subr.mxu0 0.0
    %926 = vmatpush1.msra.mxu0 %v875
    %927 = vmatprep.subr.mxu0 0.0
    %928 = vmatpush1.msra.mxu0 %v876
    %929 = vmatprep.subr.mxu0 0.0
    %930 = vmatpush1.msra.mxu0 %v877
    %931 = vmatprep.subr.mxu0 0.0
    %932 = vmatpush1.msra.mxu0 %v878
    %933 = vmatprep.subr.mxu0 0.0
    %934 = vmatpush1.msra.mxu0 %v879
    %935 = vmatprep.subr.mxu0 0.0
    %936 = vmatpush1.msra.mxu0 %v880
    %937 = vmatprep.subr.mxu0 0.0
    %938 = vmatpush1.msra.mxu0 %v881
    %939 = vmatprep.subr.mxu0 0.0
    %940 = vmatpush1.msra.mxu0 %v882
    %941 = vmatprep.subr.mxu0 0.0
    %942 = vmatpush1.msra.mxu0 %v883
    %943 = vmatprep.subr.mxu0 0.0
    %944 = vmatpush1.msra.mxu0 %v884
    %945 = vmatprep.subr.mxu0 0.0
    %946 = vmatpush1.msra.mxu0 %v885
    %947 = vmatprep.subr.mxu0 0.0
    %948 = vmatpush1.msra.mxu0 %v886
    %949 = vmatprep.subr.mxu0 0.0
    %950 = vmatpush1.msra.mxu0 %v887
    %951 = vmatprep.subr.mxu0 0.0
    %952 = vmatpush1.msra.mxu0 %v888
    %953 = vmatprep.subr.mxu0 0.0
    %954 = vmatpush1.msra.mxu0 %v889
    %955 = vmatprep.subr.mxu0 0.0
    %956 = vmatpush1.msra.mxu0 %v890
    %957 = vmatprep.subr.mxu0 0.0
    %958 = vmatpush1.msra.mxu0 %v891
    %959 = vmatprep.subr.mxu0 0.0
    %960 = vmatpush1.msra.mxu0 %v892
    %961 = vmatprep.subr.mxu0 0.0
    %962 = vmatpush1.msra.mxu0 %v893
    %963 = vmatprep.subr.mxu0 0.0
    %964 = vmatpush1.msra.mxu0 %v894
    %965 = vmatprep.subr.mxu0 0.0
    %966 = vmatpush1.msra.mxu0 %v895
    %967 = vmatprep.subr.mxu0 0.0
    %968 = vmatpush1.msra.mxu0 %v896
    %969 = vmatprep.subr.mxu0 0.0
    %970 = vmatpush1.msra.mxu0 %v897
    %971 = vmatprep.subr.mxu0 0.0
    %972 = vmatpush1.msra.mxu0 %v898
    %973 = vmatprep.subr.mxu0 0.0
    %974 = vmatpush1.msra.mxu0 %v899
    %975 = vmatprep.subr.mxu0 0.0
    %976 = vmatpush1.msra.mxu0 %v900
    %977 = vmatprep.subr.mxu0 0.0
    %978 = vmatpush1.msra.mxu0 %v901
    %979 = vmatprep.subr.mxu0 0.0
    %980 = vmatpush1.msra.mxu0 %v902
    %981 = vmatprep.subr.mxu0 0.0
    %982 = vmatpush1.msra.mxu0 %v903
    %983 = vmatprep.subr.mxu0 0.0
    %984 = vmatpush1.msra.mxu0 %v904
    %985 = vmatprep.mubr.f32.mxu0 %v870
    %986 = vmatmul.mubr.f32.gmra.mrb[0].mxu0 %v868
    %v987 = vpop.f32.mrb[0].mxu0
    %v988 = vadd.f32 0.0, %v987
    %v989 = vpop.f32.mrb[0].mxu0
    %990 = vdwg.mxu0
    %991 = vmatprep.subr.mxu0 0.0
    %992 = vmatpush1.msra.mxu0 %v905
    %993 = vmatprep.subr.mxu0 0.0
    %994 = vmatpush1.msra.mxu0 %v906
    %995 = vmatprep.subr.mxu0 0.0
    %996 = vmatpush1.msra.mxu0 %v907
    %997 = vmatprep.subr.mxu0 0.0
    %998 = vmatpush1.msra.mxu0 %v908
    %999 = vmatprep.subr.mxu0 0.0
    %1000 = vmatpush1.msra.mxu0 %v909
    %1001 = vmatprep.subr.mxu0 0.0
    %1002 = vmatpush1.msra.mxu0 %v910
    %1003 = vmatprep.subr.mxu0 0.0
    %1004 = vmatpush1.msra.mxu0 %v911
    %1005 = vmatprep.subr.mxu0 0.0
    %1006 = vmatpush1.msra.mxu0 %v912
    %1007 = vmatprep.subr.mxu0 0.0
    %1008 = vmatpush1.msra.mxu0 %v913
    %1009 = vmatprep.subr.mxu0 0.0
    %1010 = vmatpush1.msra.mxu0 %v914
    %1011 = vmatprep.subr.mxu0 0.0
    %1012 = vmatpush1.msra.mxu0 %v915
    %1013 = vmatprep.subr.mxu0 0.0
    %1014 = vmatpush1.msra.mxu0 %v916
    %1015 = vmatprep.subr.mxu0 0.0
    %1016 = vmatpush1.msra.mxu0 %v917
    %1017 = vmatprep.subr.mxu0 0.0
    %1018 = vmatpush1.msra.mxu0 %v918
    %1019 = vmatprep.subr.mxu0 0.0
    %1020 = vmatpush1.msra.mxu0 %v919
    %1021 = vmatprep.subr.mxu0 0.0
    %1022 = vmatpush1.msra.mxu0 %v920
    %1023 = vmatprep.subr.mxu0 0.0
    %1024 = vmatpush1.msra.mxu0 0.0
    %1025 = vmatprep.subr.mxu0 0.0
    %1026 = vmatpush1.msra.mxu0 0.0
    %1027 = vmatprep.subr.mxu0 0.0
    %1028 = vmatpush1.msra.mxu0 0.0
    %1029 = vmatprep.subr.mxu0 0.0
    %1030 = vmatpush1.msra.mxu0 0.0
    %1031 = vmatprep.subr.mxu0 0.0
    %1032 = vmatpush1.msra.mxu0 0.0
    %1033 = vmatprep.subr.mxu0 0.0
    %1034 = vmatpush1.msra.mxu0 0.0
    %1035 = vmatprep.subr.mxu0 0.0
    %1036 = vmatpush1.msra.mxu0 0.0
    %1037 = vmatprep.subr.mxu0 0.0
    %1038 = vmatpush1.msra.mxu0 0.0
    %1039 = vmatprep.subr.mxu0 0.0
    %1040 = vmatpush1.msra.mxu0 0.0
    %1041 = vmatprep.subr.mxu0 0.0
    %1042 = vmatpush1.msra.mxu0 0.0
    %1043 = vmatprep.subr.mxu0 0.0
    %1044 = vmatpush1.msra.mxu0 0.0
    %1045 = vmatprep.subr.mxu0 0.0
    %1046 = vmatpush1.msra.mxu0 0.0
    %1047 = vmatprep.subr.mxu0 0.0
    %1048 = vmatpush1.msra.mxu0 0.0
    %1049 = vmatprep.subr.mxu0 0.0
    %1050 = vmatpush1.msra.mxu0 0.0
    %1051 = vmatprep.subr.mxu0 0.0
    %1052 = vmatpush1.msra.mxu0 0.0
    %1053 = vmatprep.subr.mxu0 0.0
    %1054 = vmatpush1.msra.mxu0 0.0
    %1055 = vmatprep.mubr.f32.mxu0 0.0
    %1056 = vmatmul.mubr.f32.gmra.mrb[0].mxu0 %v872
    %v1057 = vpop.f32.mrb[0].mxu0
    %v1058 = vadd.f32 %v988, %v1057
    %v1059 = vpop.f32.mrb[0].mxu0
    %1060 = vdwg.mxu0
    %v1061 = vmax.f32 %v1058, 1e-30
    %v1062 = vrcp.pop %v1061
    %v1063 = vld [vmem:[#allocation10] sm:$0xff]
    %v1064 = vld [vmem:[#allocation10 + $0x8] sm:$0xff]
    %v1065 = vld [vmem:[#allocation10 + $0x10] sm:$0xff]
    %v1066 = vld [vmem:[#allocation10 + $0x18] sm:$0xff]
    %v1067 = vld [vmem:[#allocation10 + $0x20] sm:$0xff]
    %v1068 = vld [vmem:[#allocation10 + $0x28] sm:$0xff]
    %v1069 = vld [vmem:[#allocation10 + $0x30] sm:$0xff]
    %v1070 = vld [vmem:[#allocation10 + $0x38] sm:$0xff]
    %v1071 = vld [vmem:[#allocation10 + $0x40] sm:$0xff]
    %v1072 = vld [vmem:[#allocation10 + $0x48] sm:$0xff]
    %v1073 = vld [vmem:[#allocation10 + $0x50] sm:$0xff]
    %v1074 = vld [vmem:[#allocation10 + $0x58] sm:$0xff]
    %v1075 = vld [vmem:[#allocation10 + $0x60] sm:$0xff]
    %v1076 = vld [vmem:[#allocation10 + $0x68] sm:$0xff]
    %v1077 = vld [vmem:[#allocation10 + $0x70] sm:$0xff]
    %v1078 = vld [vmem:[#allocation10 + $0x78] sm:$0xff]
    %v1079 = vld [vmem:[#allocation10 + $0x80] sm:$0xff]
    %v1080 = vld [vmem:[#allocation10 + $0x88] sm:$0xff]
    %v1081 = vld [vmem:[#allocation10 + $0x90] sm:$0xff]
    %v1082 = vld [vmem:[#allocation10 + $0x98] sm:$0xff]
    %v1083 = vld [vmem:[#allocation10 + $0xa0] sm:$0xff]
    %v1084 = vld [vmem:[#allocation10 + $0xa8] sm:$0xff]
    %v1085 = vld [vmem:[#allocation10 + $0xb0] sm:$0xff]
    %v1086 = vld [vmem:[#allocation10 + $0xb8] sm:$0xff]
    %v1087 = vld [vmem:[#allocation10 + $0xc0] sm:$0xff]
    %v1088 = vld [vmem:[#allocation10 + $0xc8] sm:$0xff]
    %v1089 = vld [vmem:[#allocation10 + $0xd0] sm:$0xff]
    %v1090 = vld [vmem:[#allocation10 + $0xd8] sm:$0xff]
    %v1091 = vld [vmem:[#allocation10 + $0xe0] sm:$0xff]
    %v1092 = vld [vmem:[#allocation10 + $0xe8] sm:$0xff]
    %v1093 = vld [vmem:[#allocation10 + $0xf0] sm:$0xff]
    %v1094 = vld [vmem:[#allocation10 + $0xf8] sm:$0xff]
    %v1095 = vld [vmem:[#allocation10 + $0x100] sm:$0xff]
    %v1096 = vld [vmem:[#allocation10 + $0x108] sm:$0xff]
    %v1097 = vld [vmem:[#allocation10 + $0x110] sm:$0xff]
    %v1098 = vld [vmem:[#allocation10 + $0x118] sm:$0xff]
    %v1099 = vld [vmem:[#allocation10 + $0x120] sm:$0xff]
    %v1100 = vld [vmem:[#allocation10 + $0x128] sm:$0xff]
    %v1101 = vld [vmem:[#allocation10 + $0x130] sm:$0xff]
    %v1102 = vld [vmem:[#allocation10 + $0x138] sm:$0xff]
    %v1103 = vld [vmem:[#allocation10 + $0x140] sm:$0xff]
    %v1104 = vld [vmem:[#allocation10 + $0x148] sm:$0xff]
    %v1105 = vld [vmem:[#allocation10 + $0x150] sm:$0xff]
    %v1106 = vld [vmem:[#allocation10 + $0x158] sm:$0xff]
    %v1107 = vld [vmem:[#allocation10 + $0x160] sm:$0xff]
    %v1108 = vld [vmem:[#allocation10 + $0x168] sm:$0xff]
    %v1109 = vld [vmem:[#allocation10 + $0x170] sm:$0xff]
    %v1110 = vld [vmem:[#allocation10 + $0x178] sm:$0xff]
    %1111 = vmatprep.subr.mxu0 %v1064
    %1112 = vmatpush1.msra.mxu0 %v1063
    %1113 = vmatprep.subr.mxu0 %v1067
    %1114 = vmatpush1.msra.mxu0 %v1066
    %1115 = vmatprep.subr.mxu0 %v1070
    %1116 = vmatpush1.msra.mxu0 %v1069
    %1117 = vmatprep.subr.mxu0 %v1073
    %1118 = vmatpush1.msra.mxu0 %v1072
    %1119 = vmatprep.subr.mxu0 %v1076
    %1120 = vmatpush1.msra.mxu0 %v1075
    %1121 = vmatprep.subr.mxu0 %v1079
    %1122 = vmatpush1.msra.mxu0 %v1078
    %1123 = vmatprep.subr.mxu0 %v1082
    %1124 = vmatpush1.msra.mxu0 %v1081
    %1125 = vmatprep.subr.mxu0 %v1085
    %1126 = vmatpush1.msra.mxu0 %v1084
    %1127 = vmatprep.subr.mxu0 %v1088
    %1128 = vmatpush1.msra.mxu0 %v1087
    %1129 = vmatprep.subr.mxu0 %v1091
    %1130 = vmatpush1.msra.mxu0 %v1090
    %1131 = vmatprep.subr.mxu0 %v1094
    %1132 = vmatpush1.msra.mxu0 %v1093
    %1133 = vmatprep.subr.mxu0 %v1097
    %1134 = vmatpush1.msra.mxu0 %v1096
    %1135 = vmatprep.subr.mxu0 %v1100
    %1136 = vmatpush1.msra.mxu0 %v1099
    %1137 = vmatprep.subr.mxu0 %v1103
    %1138 = vmatpush1.msra.mxu0 %v1102
    %1139 = vmatprep.subr.mxu0 %v1106
    %1140 = vmatpush1.msra.mxu0 %v1105
    %1141 = vmatprep.subr.mxu0 %v1109
    %1142 = vmatpush1.msra.mxu0 %v1108
    %1143 = vmatprep.subr.mxu0 0.0
    %1144 = vmatpush1.msra.mxu0 0.0
    %1145 = vmatprep.subr.mxu0 0.0
    %1146 = vmatpush1.msra.mxu0 0.0
    %1147 = vmatprep.subr.mxu0 0.0
    %1148 = vmatpush1.msra.mxu0 0.0
    %1149 = vmatprep.subr.mxu0 0.0
    %1150 = vmatpush1.msra.mxu0 0.0
    %1151 = vmatprep.subr.mxu0 0.0
    %1152 = vmatpush1.msra.mxu0 0.0
    %1153 = vmatprep.subr.mxu0 0.0
    %1154 = vmatpush1.msra.mxu0 0.0
    %1155 = vmatprep.subr.mxu0 0.0
    %1156 = vmatpush1.msra.mxu0 0.0
    %1157 = vmatprep.subr.mxu0 0.0
    %1158 = vmatpush1.msra.mxu0 0.0
    %1159 = vmatprep.subr.mxu0 0.0
    %1160 = vmatpush1.msra.mxu0 0.0
    %1161 = vmatprep.subr.mxu0 0.0
    %1162 = vmatpush1.msra.mxu0 0.0
    %1163 = vmatprep.subr.mxu0 0.0
    %1164 = vmatpush1.msra.mxu0 0.0
    %1165 = vmatprep.subr.mxu0 0.0
    %1166 = vmatpush1.msra.mxu0 0.0
    %1167 = vmatprep.subr.mxu0 0.0
    %1168 = vmatpush1.msra.mxu0 0.0
    %1169 = vmatprep.subr.mxu0 0.0
    %1170 = vmatpush1.msra.mxu0 0.0
    %1171 = vmatprep.subr.mxu0 0.0
    %1172 = vmatpush1.msra.mxu0 0.0
    %1173 = vmatprep.subr.mxu0 0.0
    %1174 = vmatpush1.msra.mxu0 0.0
    %1175 = vmatprep.mubr.f32.mxu0 0.0
    %1176 = vmatmul.mubr.f32.gmra.mrb[0].mxu0 %v1062
    %v1177 = vpop.f32.mrb[0].mxu0
    %v1178 = vadd.f32 0.0, %v1177
    %v1179 = vpop.f32.mrb[0].mxu0
    %v1180 = vadd.f32 0.0, %v1179
    %1181 = vdwg.mxu0
    %1182 = vmatprep.subr.mxu0 0.0
    %1183 = vmatpush1.msra.mxu0 %v1065
    %1184 = vmatprep.subr.mxu0 0.0
    %1185 = vmatpush1.msra.mxu0 %v1068
    %1186 = vmatprep.subr.mxu0 0.0
    %1187 = vmatpush1.msra.mxu0 %v1071
    %1188 = vmatprep.subr.mxu0 0.0
    %1189 = vmatpush1.msra.mxu0 %v1074
    %1190 = vmatprep.subr.mxu0 0.0
    %1191 = vmatpush1.msra.mxu0 %v1077
    %1192 = vmatprep.subr.mxu0 0.0
    %1193 = vmatpush1.msra.mxu0 %v1080
    %1194 = vmatprep.subr.mxu0 0.0
    %1195 = vmatpush1.msra.mxu0 %v1083
    %1196 = vmatprep.subr.mxu0 0.0
    %1197 = vmatpush1.msra.mxu0 %v1086
    %1198 = vmatprep.subr.mxu0 0.0
    %1199 = vmatpush1.msra.mxu0 %v1089
    %1200 = vmatprep.subr.mxu0 0.0
    %1201 = vmatpush1.msra.mxu0 %v1092
    %1202 = vmatprep.subr.mxu0 0.0
    %1203 = vmatpush1.msra.mxu0 %v1095
    %1204 = vmatprep.subr.mxu0 0.0
    %1205 = vmatpush1.msra.mxu0 %v1098
    %1206 = vmatprep.subr.mxu0 0.0
    %1207 = vmatpush1.msra.mxu0 %v1101
    %1208 = vmatprep.subr.mxu0 0.0
    %1209 = vmatpush1.msra.mxu0 %v1104
    %1210 = vmatprep.subr.mxu0 0.0
    %1211 = vmatpush1.msra.mxu0 %v1107
    %1212 = vmatprep.subr.mxu0 0.0
    %1213 = vmatpush1.msra.mxu0 %v1110
    %1214 = vmatprep.subr.mxu0 0.0
    %1215 = vmatpush1.msra.mxu0 0.0
    %1216 = vmatprep.subr.mxu0 0.0
    %1217 = vmatpush1.msra.mxu0 0.0
    %1218 = vmatprep.subr.mxu0 0.0
    %1219 = vmatpush1.msra.mxu0 0.0
    %1220 = vmatprep.subr.mxu0 0.0
    %1221 = vmatpush1.msra.mxu0 0.0
    %1222 = vmatprep.subr.mxu0 0.0
    %1223 = vmatpush1.msra.mxu0 0.0
    %1224 = vmatprep.subr.mxu0 0.0
    %1225 = vmatpush1.msra.mxu0 0.0
    %1226 = vmatprep.subr.mxu0 0.0
    %1227 = vmatpush1.msra.mxu0 0.0
    %1228 = vmatprep.subr.mxu0 0.0
    %1229 = vmatpush1.msra.mxu0 0.0
    %1230 = vmatprep.subr.mxu0 0.0
    %1231 = vmatpush1.msra.mxu0 0.0
    %1232 = vmatprep.subr.mxu0 0.0
    %1233 = vmatpush1.msra.mxu0 0.0
    %1234 = vmatprep.subr.mxu0 0.0
    %1235 = vmatpush1.msra.mxu0 0.0
    %1236 = vmatprep.subr.mxu0 0.0
    %1237 = vmatpush1.msra.mxu0 0.0
    %1238 = vmatprep.subr.mxu0 0.0
    %1239 = vmatpush1.msra.mxu0 0.0
    %1240 = vmatprep.subr.mxu0 0.0
    %1241 = vmatpush1.msra.mxu0 0.0
    %1242 = vmatprep.subr.mxu0 0.0
    %1243 = vmatpush1.msra.mxu0 0.0
    %1244 = vmatprep.subr.mxu0 0.0
    %1245 = vmatpush1.msra.mxu0 0.0
    %1246 = vmatprep.mubr.f32.mxu0 0.0
    %1247 = vmatmul.mubr.f32.gmra.mrb[0].mxu0 %v1062
    %v1248 = vpop.f32.mrb[0].mxu0
    %v1249 = vadd.f32 0.0, %v1248
    %v1250 = vpop.f32.mrb[0].mxu0
    %1251 = vdwg.mxu0
    %v1252 = vmul.f32 %v868, %v1178
    %v1253 = vmul.f32 %v870, %v1180
    %v1254 = vmul.f32 %v872, %v1249
    %1255 = vst [vmem:[#allocation13 + $0x8] sm:$0xff] %v1252
    %1256 = vst [vmem:[#allocation13 + $0x10] sm:$0xff] %v1253
    %1257 = vst [vmem:[#allocation13 + $0x18] sm:$0xff] %v1254
    %1258 = vmax.xlane.f32.xlu0 %v847
    %v1259 = vpop.xlane.xlu0 %1258
    %v1260 = vsub.f32 %v847, %v1259
    %v1261 = vmul.f32 %v1260, 1.442695
    %v1262 = vpow.pop %v1261
    %v1263 = vld [vmem:[%s13] sm:$0xff]
    %v1264 = vld [vmem:[%s13 + $0x8] sm:$0xff]
    %v1265 = vld [vmem:[%s13 + $0x10] sm:$0xff]
    %v1266 = vld [vmem:[%s13 + $0x18] sm:$0xff]
    %v1267 = vld [vmem:[%s13 + $0x20] sm:$0xff]
    %v1268 = vld [vmem:[%s13 + $0x28] sm:$0xff]
    %v1269 = vld [vmem:[%s13 + $0x30] sm:$0xff]
    %v1270 = vld [vmem:[%s13 + $0x38] sm:$0xff]
    %v1271 = vld [vmem:[%s13 + $0x40] sm:$0xff]
    %v1272 = vld [vmem:[%s13 + $0x48] sm:$0xff]
    %v1273 = vld [vmem:[%s13 + $0x50] sm:$0xff]
    %v1274 = vld [vmem:[%s13 + $0x58] sm:$0xff]
    %v1275 = vld [vmem:[%s13 + $0x60] sm:$0xff]
    %v1276 = vld [vmem:[%s13 + $0x68] sm:$0xff]
    %v1277 = vld [vmem:[%s13 + $0x70] sm:$0xff]
    %v1278 = vld [vmem:[%s13 + $0x78] sm:$0xff]
    %1279 = vmatprep.subr.mxu0 0.0
    %1280 = vmatpush1.msra.mxu0 %v1263
    %1281 = vmatprep.subr.mxu0 0.0
    %1282 = vmatpush1.msra.mxu0 %v1264
    %1283 = vmatprep.subr.mxu0 0.0
    %1284 = vmatpush1.msra.mxu0 %v1265
    %1285 = vmatprep.subr.mxu0 0.0
    %1286 = vmatpush1.msra.mxu0 %v1266
    %1287 = vmatprep.subr.mxu0 0.0
    %1288 = vmatpush1.msra.mxu0 %v1267
    %1289 = vmatprep.subr.mxu0 0.0
    %1290 = vmatpush1.msra.mxu0 %v1268
    %1291 = vmatprep.subr.mxu0 0.0
    %1292 = vmatpush1.msra.mxu0 %v1269
    %1293 = vmatprep.subr.mxu0 0.0
    %1294 = vmatpush1.msra.mxu0 %v1270
    %1295 = vmatprep.subr.mxu0 0.0
    %1296 = vmatpush1.msra.mxu0 %v1271
    %1297 = vmatprep.subr.mxu0 0.0
    %1298 = vmatpush1.msra.mxu0 %v1272
    %1299 = vmatprep.subr.mxu0 0.0
    %1300 = vmatpush1.msra.mxu0 %v1273
    %1301 = vmatprep.subr.mxu0 0.0
    %1302 = vmatpush1.msra.mxu0 %v1274
    %1303 = vmatprep.subr.mxu0 0.0
    %1304 = vmatpush1.msra.mxu0 %v1275
    %1305 = vmatprep.subr.mxu0 0.0
    %1306 = vmatpush1.msra.mxu0 %v1276
    %1307 = vmatprep.subr.mxu0 0.0
    %1308 = vmatpush1.msra.mxu0 %v1277
    %1309 = vmatprep.subr.mxu0 0.0
    %1310 = vmatpush1.msra.mxu0 %v1278
    %1311 = vmatprep.subr.mxu0 0.0
    %1312 = vmatpush1.msra.mxu0 0.0
    %1313 = vmatprep.subr.mxu0 0.0
    %1314 = vmatpush1.msra.mxu0 0.0
    %1315 = vmatprep.subr.mxu0 0.0
    %1316 = vmatpush1.msra.mxu0 0.0
    %1317 = vmatprep.subr.mxu0 0.0
    %1318 = vmatpush1.msra.mxu0 0.0
    %1319 = vmatprep.subr.mxu0 0.0
    %1320 = vmatpush1.msra.mxu0 0.0
    %1321 = vmatprep.subr.mxu0 0.0
    %1322 = vmatpush1.msra.mxu0 0.0
    %1323 = vmatprep.subr.mxu0 0.0
    %1324 = vmatpush1.msra.mxu0 0.0
    %1325 = vmatprep.subr.mxu0 0.0
    %1326 = vmatpush1.msra.mxu0 0.0
    %1327 = vmatprep.subr.mxu0 0.0
    %1328 = vmatpush1.msra.mxu0 0.0
    %1329 = vmatprep.subr.mxu0 0.0
    %1330 = vmatpush1.msra.mxu0 0.0
    %1331 = vmatprep.subr.mxu0 0.0
    %1332 = vmatpush1.msra.mxu0 0.0
    %1333 = vmatprep.subr.mxu0 0.0
    %1334 = vmatpush1.msra.mxu0 0.0
    %1335 = vmatprep.subr.mxu0 0.0
    %1336 = vmatpush1.msra.mxu0 0.0
    %1337 = vmatprep.subr.mxu0 0.0
    %1338 = vmatpush1.msra.mxu0 0.0
    %1339 = vmatprep.subr.mxu0 0.0
    %1340 = vmatpush1.msra.mxu0 0.0
    %1341 = vmatprep.subr.mxu0 0.0
    %1342 = vmatpush1.msra.mxu0 0.0
    %1343 = vmatprep.mubr.f32.mxu0 0.0
    %1344 = vmatmul.mubr.f32.gmra.mrb[0].mxu0 %v1262
    %v1345 = vpop.f32.mrb[0].mxu0
    %v1346 = vadd.f32 0.0, %v1345
    %v1347 = vpop.f32.mrb[0].mxu0
    %1348 = vdwg.mxu0
    %v1349 = vmax.f32 %v1346, 1e-30
    %v1350 = vrcp.pop %v1349
    %v1351 = vld [vmem:[#allocation11] sm:$0xff]
    %v1352 = vld [vmem:[#allocation11 + $0x8] sm:$0xff]
    %v1353 = vld [vmem:[#allocation11 + $0x10] sm:$0xff]
    %v1354 = vld [vmem:[#allocation11 + $0x18] sm:$0xff]
    %v1356 = vsel %vm141, %v1350, 0
    %1358 = vmatprep.subr.mxu0 0.0
    %1359 = vmatpush1.msra.mxu0 %v1351
    %1360 = vmatprep.subr.mxu0 0.0
    %1361 = vmatpush1.msra.mxu0 %v1352
    %1362 = vmatprep.subr.mxu0 0.0
    %1363 = vmatpush1.msra.mxu0 %v1353
    %1364 = vmatprep.subr.mxu0 0.0
    %1365 = vmatpush1.msra.mxu0 %v1354
    %1366 = vmatprep.subr.mxu0 0.0
    %1367 = vmatpush1.msra.mxu0 0.0
    %1368 = vmatprep.subr.mxu0 0.0
    %1369 = vmatpush1.msra.mxu0 0.0
    %1370 = vmatprep.subr.mxu0 0.0
    %1371 = vmatpush1.msra.mxu0 0.0
    %1372 = vmatprep.subr.mxu0 0.0
    %1373 = vmatpush1.msra.mxu0 0.0
    %1374 = vmatprep.subr.mxu0 0.0
    %1375 = vmatpush1.msra.mxu0 0.0
    %1376 = vmatprep.subr.mxu0 0.0
    %1377 = vmatpush1.msra.mxu0 0.0
    %1378 = vmatprep.subr.mxu0 0.0
    %1379 = vmatpush1.msra.mxu0 0.0
    %1380 = vmatprep.subr.mxu0 0.0
    %1381 = vmatpush1.msra.mxu0 0.0
    %1382 = vmatprep.subr.mxu0 0.0
    %1383 = vmatpush1.msra.mxu0 0.0
    %1384 = vmatprep.subr.mxu0 0.0
    %1385 = vmatpush1.msra.mxu0 0.0
    %1386 = vmatprep.subr.mxu0 0.0
    %1387 = vmatpush1.msra.mxu0 0.0
    %1388 = vmatprep.subr.mxu0 0.0
    %1389 = vmatpush1.msra.mxu0 0.0
    %1390 = vmatprep.subr.mxu0 0.0
    %1391 = vmatpush1.msra.mxu0 0.0
    %1392 = vmatprep.subr.mxu0 0.0
    %1393 = vmatpush1.msra.mxu0 0.0
    %1394 = vmatprep.subr.mxu0 0.0
    %1395 = vmatpush1.msra.mxu0 0.0
    %1396 = vmatprep.subr.mxu0 0.0
    %1397 = vmatpush1.msra.mxu0 0.0
    %1398 = vmatprep.subr.mxu0 0.0
    %1399 = vmatpush1.msra.mxu0 0.0
    %1400 = vmatprep.subr.mxu0 0.0
    %1401 = vmatpush1.msra.mxu0 0.0
    %1402 = vmatprep.subr.mxu0 0.0
    %1403 = vmatpush1.msra.mxu0 0.0
    %1404 = vmatprep.subr.mxu0 0.0
    %1405 = vmatpush1.msra.mxu0 0.0
    %1406 = vmatprep.subr.mxu0 0.0
    %1407 = vmatpush1.msra.mxu0 0.0
    %1408 = vmatprep.subr.mxu0 0.0
    %1409 = vmatpush1.msra.mxu0 0.0
    %1410 = vmatprep.subr.mxu0 0.0
    %1411 = vmatpush1.msra.mxu0 0.0
    %1412 = vmatprep.subr.mxu0 0.0
    %1413 = vmatpush1.msra.mxu0 0.0
    %1414 = vmatprep.subr.mxu0 0.0
    %1415 = vmatpush1.msra.mxu0 0.0
    %1416 = vmatprep.subr.mxu0 0.0
    %1417 = vmatpush1.msra.mxu0 0.0
    %1418 = vmatprep.subr.mxu0 0.0
    %1419 = vmatpush1.msra.mxu0 0.0
    %1420 = vmatprep.subr.mxu0 0.0
    %1421 = vmatpush1.msra.mxu0 0.0
    %1422 = vmatprep.mubr.f32.mxu0 0.0
    %1423 = vmatmul.mubr.f32.gmra.mrb[0].mxu0 %v1356
    %v1424 = vpop.f32.mrb[0].mxu0
    %v1425 = vadd.f32 0.0, %v1424
    %v1426 = vpop.f32.mrb[0].mxu0
    %1427 = vdwg.mxu0
    %v1428 = vmul.f32 %v1262, %v1425
    %1429 = vst [vmem:[#allocation13] sm:$0xff] %v1428
    // Predicated region
    $region86: #{tpu_custom_call.1} parent=1 // pred_check
      _
    $region87: #{tpu_custom_call.1} parent=1 // pred_check_branch
      %1431 = sbr.rel (0) target = $region89
    $region88: #{tpu_custom_call.1} parent=1 // pred_region
      %s1433 = ssub.s32 512, 512
      %1434 = vsyncadd [#allocation4], %s1433
      %s1436 = sshll.u32 [#allocation13], 4
      %s1437 = int_to_ptr.vmem [resolvable:$true] %s1436
      %1439 = dma.vmem_to_hbm [thread:$0]  %s1437, 512, %s15, [#allocation4]
    $region89: #{tpu_custom_call.1} parent=1 // pred_fallthru
      _
    // Predicated region
    $region90: #{tpu_custom_call.1} parent=1 // pred_check
      _
    $region91: #{tpu_custom_call.1} parent=1 // pred_check_branch
      %1441 = sbr.rel (0) target = $region93
    $region92: #{tpu_custom_call.1} parent=1 // pred_region
      %1442 = dma.done [#allocation4], 512
    $region93: #{tpu_custom_call.1} parent=1 // pred_fallthru
      _
    %1443 = vsyncpa [#allocation3], 1
    %1444 = vsyncpa [#allocation6], 1
    %1445 = vsyncpa [#allocation9], 1
    %1446 = vsyncpa [#allocation12], 1
    %1447 = vsyncpa [#allocation4], 1

</llo_original>
